<compile_context>
chip_gen: v5e
topology: v5e:2x2
jax: 0.10.0
libtpu: 0.0.40
codegen_flags: <defaults>
</compile_context>

<pallas_src>
import math

import numpy as np
import jax
import jax.numpy as jnp
from jax.experimental import pallas as pl
from jax.experimental.pallas import tpu as pltpu

# ------------------------- small model config -------------------------
BLOCK_SIZE = 16
VOCAB_SIZE = 256
N_LAYER = 2
N_HEAD = 4
N_EMBD = 32
NORM_EPS = 1e-5
BATCH = 2
SEQ = 8
SECT = 128          # per-section lane width (one vreg column) for q/k/v/qR/kR
# dropout = 0.0 -> identity; is_causal=True; use_rope=True; bias=False


# ------------------------- in-kernel math helpers -------------------------
def _erf(x):
    # Abramowitz & Stegun 7.1.26 (max abs err ~1.5e-7); only exp/mul/add/div.
    a1, a2, a3, a4, a5 = (0.254829592, -0.284496736, 1.421413741,
                          -1.453152027, 1.061405429)
    p = 0.3275911
    sgn = jnp.where(x >= 0.0, 1.0, -1.0)
    ax = jnp.abs(x)
    t = 1.0 / (1.0 + p * ax)
    poly = ((((a5 * t + a4) * t + a3) * t + a2) * t + a1) * t
    return sgn * (1.0 - poly * jnp.exp(-ax * ax))


def _gelu_exact(x):
    # matches nn.GELU() (erf-based) to ~1e-7
    return 0.5 * x * (1.0 + _erf(x * 0.7071067811865476))


def _rmsnorm(x, eps):
    # norm gains are folded into the following weight matrices at pack time
    return x * jax.lax.rsqrt(jnp.mean(x * x, axis=-1, keepdims=True) + eps)


# ------------------------- fused Pallas kernel -------------------------
def _make_fused_kernel(n_layer, n_head, batch, seq, eps):
    def kernel(idx_ref, tbl_ref, wqkv_ref, wfc_ref, w32_ref, wlm_ref, o_ref):
        BT = idx_ref.shape[0]               # batch*seq rows
        C, V = wlm_ref.shape                # n_embd, vocab
        hd = C // n_head
        P = SECT

        # ---- token embedding: gather-as-matmul (no separate XLA dispatch) ----
        ids = idx_ref[...]                                              # (BT,1) i32
        vocab_iota = jax.lax.broadcasted_iota(jnp.int32, (BT, V), 1)
        onehot = jnp.where(vocab_iota == ids, 1.0, 0.0)
        x = jnp.dot(onehot, w32_ref[0:V, :],
                    preferred_element_type=jnp.float32)                 # (BT, C)

        # ---- shared tables (hoisted once; 128-aligned slices are free views) ----
        cosv = tbl_ref[:, 0:P]                                          # (BT, P)
        sinv = tbl_ref[:, P:2 * P]
        bias = tbl_ref[:, 2 * P:2 * P + BT]                             # (BT, BT)
        sel = tbl_ref[0:batch, 3 * P:3 * P + BT]                        # (B, BT)
        lane = jax.lax.broadcasted_iota(jnp.int32, (1, P), 1)
        head_masks = [
            jnp.where((lane >= h * hd) & (lane < (h + 1) * hd), 1.0, 0.0)
            for h in range(n_head)]

        for l in range(n_layer):
            wqkv = wqkv_ref[l * C:(l + 1) * C, :]                       # (C, 5P)
            wfc = wfc_ref[l * C:(l + 1) * C, :]                         # (C, 4C)
            base = V + l * (P + 4 * C)
            wop = w32_ref[base:base + P, :]                             # (P, C)
            wmp = w32_ref[base + P:base + P + 4 * C, :]                 # (4C, C)

            # ---- attention (norm gain, 1/sqrt(hd), RoPE pair-swap pre-folded) ----
            h = _rmsnorm(x, eps)
            qkv = jnp.dot(h, wqkv, preferred_element_type=jnp.float32)  # (BT, 5P)
            q = qkv[:, 0:P] * cosv + qkv[:, 3 * P:4 * P] * sinv
            k = qkv[:, P:2 * P] * cosv + qkv[:, 4 * P:5 * P] * sinv
            v = qkv[:, 2 * P:3 * P]

            y = None
            for m in head_masks:                                        # static unroll
                s = jax.lax.dot_general(q, k * m, (((1,), (1,)), ((), ())),
                                        preferred_element_type=jnp.float32)
                # scores are O(1) (scale folded into wq) -> no max-subtraction;
                # -1e30 mask entries underflow exp() to exactly 0.
                e = jnp.exp(s + bias)
                p = e * pl.reciprocal(jnp.sum(e, axis=-1, keepdims=True),
                                      approx=True)
                yh = jnp.dot(p, v * m, preferred_element_type=jnp.float32)
                y = yh if y is None else y + yh
            # single output projection per layer (pad rows of wop are zero)
            x = x + jnp.dot(y, wop, preferred_element_type=jnp.float32)

            # ---- MLP ----
            h2 = _rmsnorm(x, eps)
            a = jnp.dot(h2, wfc, preferred_element_type=jnp.float32)
            x = x + jnp.dot(_gelu_exact(a), wmp,
                            preferred_element_type=jnp.float32)

        # ---- final norm + tied lm head on the LAST token of each sequence ----
        last = jnp.dot(sel, x, preferred_element_type=jnp.float32)      # (B, C)
        hl = _rmsnorm(last, eps)
        o_ref[...] = jnp.dot(hl, wlm_ref[...],
                             preferred_element_type=jnp.float32)        # (B, V)

    return kernel


@jax.jit
def gpt_forward(idx, tbl, wqkv_all, wfc_all, w32_all, wlm):
    """Full GPT forward (inference path).  Returns (logits (B,1,V), None)."""
    B, T = idx.shape
    C, V = wlm.shape
    idx2d = idx.reshape(B * T, 1).astype(jnp.int32)

    kernel = _make_fused_kernel(N_LAYER, N_HEAD, B, T, NORM_EPS)
    vmem = pl.BlockSpec(memory_space=pltpu.MemorySpace.VMEM)
    inputs = (idx2d, tbl, wqkv_all, wfc_all, w32_all, wlm)

    logits2d = pl.pallas_call(
        kernel,
        out_shape=jax.ShapeDtypeStruct((B, V), jnp.float32),
        in_specs=[vmem] * len(inputs),
        out_specs=vmem,
    )(*inputs)
    return logits2d[:, None, :], None


# ------------------------- parameter / table setup (glue) -------------------------
def init_params(key):
    std = 0.02
    proj_std = 0.02 / math.sqrt(2 * N_LAYER)
    keys = jax.random.split(key, 1 + 4 * N_LAYER)
    wte = jax.random.normal(keys[0], (VOCAB_SIZE, N_EMBD), jnp.float32) * std  # tied lm_head
    layers = []
    ki = 1
    for _ in range(N_LAYER):
        wqkv = jax.random.normal(keys[ki], (N_EMBD, 3 * N_EMBD), jnp.float32) * std; ki += 1
        wop = jax.random.normal(keys[ki], (N_EMBD, N_EMBD), jnp.float32) * proj_std; ki += 1
        wfc = jax.random.normal(keys[ki], (N_EMBD, 4 * N_EMBD), jnp.float32) * std; ki += 1
        wmp = jax.random.normal(keys[ki], (4 * N_EMBD, N_EMBD), jnp.float32) * proj_std; ki += 1
        n1w = jnp.ones((1, N_EMBD), jnp.float32)   # RMSNorm weights init to ones
        n2w = jnp.ones((1, N_EMBD), jnp.float32)
        layers.append((n1w, wqkv, wop, n2w, wfc, wmp))
    nfw = jnp.ones((1, N_EMBD), jnp.float32)
    return wte, layers, nfw


def rope_tables(T, C, n_head, theta=10000.0):
    hd = C // n_head
    inv_freq = 1.0 / (theta ** (np.arange(0, hd, 2)[: hd // 2].astype(np.float64) / hd))
    ang = np.outer(np.arange(T), inv_freq)                 # (T, hd/2), pos_cis[0:T]
    cos_h = np.repeat(np.cos(ang), 2, axis=1)              # (T, hd) interleaved pairs
    sin_h = np.repeat(np.sin(ang), 2, axis=1)
    cos = np.tile(cos_h, (1, n_head)).astype(np.float32)   # (T, C) head-major repeat
    sin = np.tile(sin_h, (1, n_head)).astype(np.float32)
    R = np.zeros((C, C), np.float32)                       # rotate_pairs as matmul
    for j in range(0, C, 2):
        R[j + 1, j] = -1.0
        R[j, j + 1] = 1.0
    return jnp.asarray(cos), jnp.asarray(sin), jnp.asarray(R)


def causal_batch_bias(B, T):
    """(B*T, B*T) additive bias: 0 where same batch AND key_pos <= query_pos else -1e30."""
    bt = B * T
    i = np.arange(bt)
    same_b = (i[:, None] // T) == (i[None, :] // T)
    causal = (i[None, :] % T) <= (i[:, None] % T)
    allow = same_b & causal
    return np.where(allow, 0.0, -1e30).astype(np.float32)


def pack_for_kernel(wte, layers_raw, nfw, cos, sin, R, n_head, batch):
    """One-time packing:
       - fold RMSNorm gains into following weight rows (n1->wqkv, n2->wfc, nf->wlm),
       - fold RoPE pair-swap + 1/sqrt(hd) scale into the QKV weight,
       - pad each QKV section / RoPE table to 128 lanes (whole-vreg views in-kernel),
       - pack per-layer weights + wte into 3 slabs, and cos/sin/bias/sel into 1 table."""
    V, C = wte.shape
    hd = C // n_head
    P = SECT
    scale = 1.0 / math.sqrt(hd)
    T = cos.shape[0]
    BT = batch * T

    def padlane(w, width):
        return jnp.pad(w, ((0, 0), (0, width - w.shape[1])))

    def padrow(w, rows):
        return jnp.pad(w, ((0, rows - w.shape[0]), (0, 0)))

    # ---- shared table: [cos | sin | bias | last-token selector], all 128-lane slots
    cos_bt = padlane(jnp.tile(cos, (batch, 1)), P)                 # (BT, 128)
    sin_bt = padlane(jnp.tile(sin, (batch, 1)), P)
    bias_pad = padlane(jnp.asarray(causal_batch_bias(batch, T)), P)
    sel = np.zeros((batch, BT), np.float32)
    for b in range(batch):
        sel[b, b * T + T - 1] = 1.0                                # pick last token
    sel_pad = padrow(padlane(jnp.asarray(sel), P), BT)
    tbl = jnp.concatenate([cos_bt, sin_bt, bias_pad, sel_pad], axis=1)   # (BT, 512)

    # ---- per-layer weight slabs
    wqkv_rows, wfc_rows, w32_rows = [], [], [wte]
    for (n1w, wqkv, wop, n2w, wfc, wmp) in layers_raw:
        n1 = n1w.reshape(C, 1)
        n2 = n2w.reshape(C, 1)
        wq, wk, wv = wqkv[:, :C], wqkv[:, C:2 * C], wqkv[:, 2 * C:]
        wqf, wkf, wvf = n1 * wq, n1 * wk, n1 * wv                  # fold norm_1 gain
        sections = [wqf * scale, wkf, wvf, (wqf @ R) * scale, wkf @ R]
        wqkv_rows.append(jnp.concatenate([padlane(s, P) for s in sections], axis=1))
        wfc_rows.append(n2 * wfc)                                  # fold norm_2 gain
        w32_rows.append(padrow(wop, P))                            # (128, C) zero-pad rows
        w32_rows.append(wmp)                                       # (4C, C)
    wqkv_all = jnp.concatenate(wqkv_rows, axis=0)                  # (L*C, 5*128)
    wfc_all = jnp.concatenate(wfc_rows, axis=0)                    # (L*C, 4C)
    w32_all = jnp.concatenate(w32_rows, axis=0)                    # (V + L*(128+4C), C)
    wlm = nfw.reshape(C, 1) * wte.T                                # fold norm_f gain

    return tbl, wqkv_all, wfc_all, w32_all, wlm


# ------------------------- pure-JAX reference for validation -------------------------
def _rms_ref(x, w, eps):
    return x * jax.lax.rsqrt(jnp.mean(x * x, axis=-1, keepdims=True) + eps) * w


def gpt_reference(idx, wte, layers, nfw, cos, sin, rot):
    x = jnp.take(wte, idx, axis=0).astype(jnp.float32)
    B, T, C = x.shape
    hd = C // N_HEAD
    for (n1w, wqkv, wop, n2w, wfc, wmp) in layers:
        h = _rms_ref(x, n1w, NORM_EPS)
        qkv = h @ wqkv
        q, k, v = qkv[..., :C], qkv[..., C:2 * C], qkv[..., 2 * C:]
        q = q * cos + (q @ rot) * sin
        k = k * cos + (k @ rot) * sin
        qh = q.reshape(B, T, N_HEAD, hd).transpose(0, 2, 1, 3)
        kh = k.reshape(B, T, N_HEAD, hd).transpose(0, 2, 1, 3)
        vh = v.reshape(B, T, N_HEAD, hd).transpose(0, 2, 1, 3)
        s = jnp.einsum('bhtd,bhsd->bhts', qh, kh) / math.sqrt(hd)
        mask = jnp.where(jnp.arange(T)[None, :] > jnp.arange(T)[:, None], -1e30, 0.0)
        p = jax.nn.softmax(s + mask, axis=-1)
        y = jnp.einsum('bhts,bhsd->bhtd', p, vh).transpose(0, 2, 1, 3).reshape(B, T, C)
        x = x + y @ wop
        h2 = _rms_ref(x, n2w, NORM_EPS)
        x = x + jax.nn.gelu(h2 @ wfc, approximate=False) @ wmp
    xl = _rms_ref(x[:, -1:, :], nfw, NORM_EPS)
    return xl @ wte.T


# TODO(synk): KV-cache decode path / autoregressive generation loop and the
# cross-entropy training-loss branch are host-side control flow, not implemented
# in the kernel.

if __name__ == "__main__":
    key = jax.random.PRNGKey(0)
    pkey, ikey = jax.random.split(key)
    wte, layers_raw, nfw = init_params(pkey)
    cos, sin, rot = rope_tables(SEQ, N_EMBD, N_HEAD)
    tbl, wqkv_all, wfc_all, w32_all, wlm = pack_for_kernel(
        wte, layers_raw, nfw, cos, sin, rot, N_HEAD, BATCH)
    idx = jax.random.randint(ikey, (BATCH, SEQ), 0, VOCAB_SIZE, dtype=jnp.int32)

    logits, loss = gpt_forward(idx, tbl, wqkv_all, wfc_all, w32_all, wlm)
    logits = jax.block_until_ready(logits)
    assert logits.shape == (BATCH, 1, VOCAB_SIZE)
    assert loss is None

    ref = jax.block_until_ready(gpt_reference(idx, wte, layers_raw, nfw, cos, sin, rot))
    np.testing.assert_allclose(np.asarray(logits[:, 0, :]), np.asarray(ref[:, 0, :]),
                               rtol=2e-3, atol=2e-3)
    print("KERNEL_OK")
</pallas_src>

<mosaic_0001>
module attributes {stable_mosaic.version = 11 : i64} {
  func.func @kernel(%arg0: memref<16x1xi32, #tpu.memory_space<vmem>>, %arg1: memref<16x512xf32, #tpu.memory_space<vmem>>, %arg2: memref<64x640xf32, #tpu.memory_space<vmem>>, %arg3: memref<64x128xf32, #tpu.memory_space<vmem>>, %arg4: memref<768x32xf32, #tpu.memory_space<vmem>>, %arg5: memref<32x256xf32, #tpu.memory_space<vmem>>, %arg6: memref<2x256xf32, #tpu.memory_space<vmem>>) attributes {dimension_semantics = [], scalar_prefetch = 0 : i64, scratch_operands = 0 : i64, tpu.core_type = #tpu.core_type<tc>} {
    %c0 = arith.constant 0 : index
    %c0_0 = arith.constant 0 : index
    %0 = vector.load %arg0[%c0, %c0_0] : memref<16x1xi32, #tpu.memory_space<vmem>>, vector<16x1xi32>
    %1 = tpu.iota {dimensions = array<i32: 1>} : vector<16x256xi32>
    %2 = vector.broadcast %0 : vector<16x1xi32> to vector<16x256xi32>
    %3 = arith.cmpi eq, %1, %2 : vector<16x256xi32>
    %cst = arith.constant 1.000000e+00 : f32
    %cst_1 = arith.constant 0.000000e+00 : f32
    %4 = vector.broadcast %cst : f32 to vector<16x256xf32>
    %5 = vector.broadcast %cst_1 : f32 to vector<16x256xf32>
    %6 = arith.select %3, %4, %5 : vector<16x256xi1>, vector<16x256xf32>
    %c0_2 = arith.constant 0 : index
    %c0_3 = arith.constant 0 : index
    %7 = vector.load %arg4[%c0_2, %c0_3] : memref<768x32xf32, #tpu.memory_space<vmem>>, vector<256x32xf32>
    %cst_4 = arith.constant dense<0.000000e+00> : vector<16x32xf32>
    %8 = tpu.matmul %6, %7, %cst_4 {dimension_numbers = #tpu.dot_dimension_numbers<[1], [0], [0], [1], [0, 0, 1, 1], [], []>} : vector<16x256xf32>, vector<256x32xf32>, vector<16x32xf32> -> vector<16x32xf32>
    %c0_5 = arith.constant 0 : index
    %c0_6 = arith.constant 0 : index
    %9 = vector.load %arg1[%c0_5, %c0_6] : memref<16x512xf32, #tpu.memory_space<vmem>>, vector<16x128xf32>
    %c0_7 = arith.constant 0 : index
    %c128 = arith.constant 128 : index
    %10 = vector.load %arg1[%c0_7, %c128] : memref<16x512xf32, #tpu.memory_space<vmem>>, vector<16x128xf32>
    %c0_8 = arith.constant 0 : index
    %c256 = arith.constant 256 : index
    %11 = vector.load %arg1[%c0_8, %c256] : memref<16x512xf32, #tpu.memory_space<vmem>>, vector<16x16xf32>
    %c0_9 = arith.constant 0 : index
    %c384 = arith.constant 384 : index
    %12 = vector.load %arg1[%c0_9, %c384] : memref<16x512xf32, #tpu.memory_space<vmem>>, vector<2x16xf32>
    %13 = tpu.iota {dimensions = array<i32: 1>} : vector<1x128xi32>
    %c0_i32 = arith.constant 0 : i32
    %14 = vector.broadcast %c0_i32 : i32 to vector<1x128xi32>
    %15 = arith.cmpi sge, %13, %14 : vector<1x128xi32>
    %c8_i32 = arith.constant 8 : i32
    %16 = vector.broadcast %c8_i32 : i32 to vector<1x128xi32>
    %17 = arith.cmpi slt, %13, %16 : vector<1x128xi32>
    %18 = arith.andi %15, %17 : vector<1x128xi1>
    %cst_10 = arith.constant 1.000000e+00 : f32
    %cst_11 = arith.constant 0.000000e+00 : f32
    %19 = vector.broadcast %cst_10 : f32 to vector<1x128xf32>
    %20 = vector.broadcast %cst_11 : f32 to vector<1x128xf32>
    %21 = arith.select %18, %19, %20 : vector<1x128xi1>, vector<1x128xf32>
    %c8_i32_12 = arith.constant 8 : i32
    %22 = vector.broadcast %c8_i32_12 : i32 to vector<1x128xi32>
    %23 = arith.cmpi sge, %13, %22 : vector<1x128xi32>
    %c16_i32 = arith.constant 16 : i32
    %24 = vector.broadcast %c16_i32 : i32 to vector<1x128xi32>
    %25 = arith.cmpi slt, %13, %24 : vector<1x128xi32>
    %26 = arith.andi %23, %25 : vector<1x128xi1>
    %cst_13 = arith.constant 1.000000e+00 : f32
    %cst_14 = arith.constant 0.000000e+00 : f32
    %27 = vector.broadcast %cst_13 : f32 to vector<1x128xf32>
    %28 = vector.broadcast %cst_14 : f32 to vector<1x128xf32>
    %29 = arith.select %26, %27, %28 : vector<1x128xi1>, vector<1x128xf32>
    %c16_i32_15 = arith.constant 16 : i32
    %30 = vector.broadcast %c16_i32_15 : i32 to vector<1x128xi32>
    %31 = arith.cmpi sge, %13, %30 : vector<1x128xi32>
    %c24_i32 = arith.constant 24 : i32
    %32 = vector.broadcast %c24_i32 : i32 to vector<1x128xi32>
    %33 = arith.cmpi slt, %13, %32 : vector<1x128xi32>
    %34 = arith.andi %31, %33 : vector<1x128xi1>
    %cst_16 = arith.constant 1.000000e+00 : f32
    %cst_17 = arith.constant 0.000000e+00 : f32
    %35 = vector.broadcast %cst_16 : f32 to vector<1x128xf32>
    %36 = vector.broadcast %cst_17 : f32 to vector<1x128xf32>
    %37 = arith.select %34, %35, %36 : vector<1x128xi1>, vector<1x128xf32>
    %c24_i32_18 = arith.constant 24 : i32
    %38 = vector.broadcast %c24_i32_18 : i32 to vector<1x128xi32>
    %39 = arith.cmpi sge, %13, %38 : vector<1x128xi32>
    %c32_i32 = arith.constant 32 : i32
    %40 = vector.broadcast %c32_i32 : i32 to vector<1x128xi32>
    %41 = arith.cmpi slt, %13, %40 : vector<1x128xi32>
    %42 = arith.andi %39, %41 : vector<1x128xi1>
    %cst_19 = arith.constant 1.000000e+00 : f32
    %cst_20 = arith.constant 0.000000e+00 : f32
    %43 = vector.broadcast %cst_19 : f32 to vector<1x128xf32>
    %44 = vector.broadcast %cst_20 : f32 to vector<1x128xf32>
    %45 = arith.select %42, %43, %44 : vector<1x128xi1>, vector<1x128xf32>
    %c0_21 = arith.constant 0 : index
    %c0_22 = arith.constant 0 : index
    %46 = vector.load %arg2[%c0_21, %c0_22] : memref<64x640xf32, #tpu.memory_space<vmem>>, vector<32x640xf32>
    %c0_23 = arith.constant 0 : index
    %c0_24 = arith.constant 0 : index
    %47 = vector.load %arg3[%c0_23, %c0_24] : memref<64x128xf32, #tpu.memory_space<vmem>>, vector<32x128xf32>
    %c256_25 = arith.constant 256 : index
    %c0_26 = arith.constant 0 : index
    %48 = vector.load %arg4[%c256_25, %c0_26] : memref<768x32xf32, #tpu.memory_space<vmem>>, vector<128x32xf32>
    %c384_27 = arith.constant 384 : index
    %c0_28 = arith.constant 0 : index
    %49 = vector.load %arg4[%c384_27, %c0_28] : memref<768x32xf32, #tpu.memory_space<vmem>>, vector<128x32xf32>
    %50 = arith.mulf %8, %8 : vector<16x32xf32>
    %cst_29 = arith.constant dense<0.000000e+00> : vector<16xf32>
    %51 = vector.multi_reduction <add>, %50, %cst_29 [1] : vector<16x32xf32> to vector<16xf32>
    %52 = vector.shape_cast %51 : vector<16xf32> to vector<16x1xf32>
    %cst_30 = arith.constant 3.200000e+01 : f32
    %53 = vector.broadcast %cst_30 : f32 to vector<16x1xf32>
    %54 = arith.divf %52, %53 : vector<16x1xf32>
    %cst_31 = arith.constant 9.99999974E-6 : f32
    %55 = vector.broadcast %cst_31 : f32 to vector<16x1xf32>
    %56 = arith.addf %54, %55 : vector<16x1xf32>
    %57 = math.rsqrt %56 : vector<16x1xf32>
    %58 = vector.broadcast %57 : vector<16x1xf32> to vector<16x32xf32>
    %59 = arith.mulf %8, %58 : vector<16x32xf32>
    %cst_32 = arith.constant dense<0.000000e+00> : vector<16x640xf32>
    %60 = tpu.matmul %59, %46, %cst_32 {dimension_numbers = #tpu.dot_dimension_numbers<[1], [0], [0], [1], [0, 0, 1, 1], [], []>} : vector<16x32xf32>, vector<32x640xf32>, vector<16x640xf32> -> vector<16x640xf32>
    %61 = vector.extract_strided_slice %60 {offsets = [0, 0], sizes = [16, 128], strides = [1, 1]} : vector<16x640xf32> to vector<16x128xf32>
    %62 = arith.mulf %61, %9 : vector<16x128xf32>
    %63 = vector.extract_strided_slice %60 {offsets = [0, 384], sizes = [16, 128], strides = [1, 1]} : vector<16x640xf32> to vector<16x128xf32>
    %64 = arith.mulf %63, %10 : vector<16x128xf32>
    %65 = arith.addf %62, %64 : vector<16x128xf32>
    %66 = vector.extract_strided_slice %60 {offsets = [0, 128], sizes = [16, 128], strides = [1, 1]} : vector<16x640xf32> to vector<16x128xf32>
    %67 = arith.mulf %66, %9 : vector<16x128xf32>
    %68 = vector.extract_strided_slice %60 {offsets = [0, 512], sizes = [16, 128], strides = [1, 1]} : vector<16x640xf32> to vector<16x128xf32>
    %69 = arith.mulf %68, %10 : vector<16x128xf32>
    %70 = arith.addf %67, %69 : vector<16x128xf32>
    %71 = vector.extract_strided_slice %60 {offsets = [0, 256], sizes = [16, 128], strides = [1, 1]} : vector<16x640xf32> to vector<16x128xf32>
    %72 = vector.broadcast %21 : vector<1x128xf32> to vector<16x128xf32>
    %73 = arith.mulf %70, %72 : vector<16x128xf32>
    %cst_33 = arith.constant dense<0.000000e+00> : vector<16x16xf32>
    %74 = tpu.matmul %65, %73, %cst_33 {dimension_numbers = #tpu.dot_dimension_numbers<[1], [1], [0], [0], [0, 0, 1, 0], [], []>} : vector<16x128xf32>, vector<16x128xf32>, vector<16x16xf32> -> vector<16x16xf32>
    %75 = arith.addf %74, %11 : vector<16x16xf32>
    %76 = math.exp %75 : vector<16x16xf32>
    %cst_34 = arith.constant dense<0.000000e+00> : vector<16xf32>
    %77 = vector.multi_reduction <add>, %76, %cst_34 [1] : vector<16x16xf32> to vector<16xf32>
    %78 = vector.shape_cast %77 : vector<16xf32> to vector<16x1xf32>
    %79 = tpu.reciprocal %78 {approx = true} : vector<16x1xf32> -> vector<16x1xf32>
    %80 = vector.broadcast %79 : vector<16x1xf32> to vector<16x16xf32>
    %81 = arith.mulf %76, %80 : vector<16x16xf32>
    %82 = vector.broadcast %21 : vector<1x128xf32> to vector<16x128xf32>
    %83 = arith.mulf %71, %82 : vector<16x128xf32>
    %cst_35 = arith.constant dense<0.000000e+00> : vector<16x128xf32>
    %84 = tpu.matmul %81, %83, %cst_35 {dimension_numbers = #tpu.dot_dimension_numbers<[1], [0], [0], [1], [0, 0, 1, 1], [], []>} : vector<16x16xf32>, vector<16x128xf32>, vector<16x128xf32> -> vector<16x128xf32>
    %85 = vector.broadcast %29 : vector<1x128xf32> to vector<16x128xf32>
    %86 = arith.mulf %70, %85 : vector<16x128xf32>
    %cst_36 = arith.constant dense<0.000000e+00> : vector<16x16xf32>
    %87 = tpu.matmul %65, %86, %cst_36 {dimension_numbers = #tpu.dot_dimension_numbers<[1], [1], [0], [0], [0, 0, 1, 0], [], []>} : vector<16x128xf32>, vector<16x128xf32>, vector<16x16xf32> -> vector<16x16xf32>
    %88 = arith.addf %87, %11 : vector<16x16xf32>
    %89 = math.exp %88 : vector<16x16xf32>
    %cst_37 = arith.constant dense<0.000000e+00> : vector<16xf32>
    %90 = vector.multi_reduction <add>, %89, %cst_37 [1] : vector<16x16xf32> to vector<16xf32>
    %91 = vector.shape_cast %90 : vector<16xf32> to vector<16x1xf32>
    %92 = tpu.reciprocal %91 {approx = true} : vector<16x1xf32> -> vector<16x1xf32>
    %93 = vector.broadcast %92 : vector<16x1xf32> to vector<16x16xf32>
    %94 = arith.mulf %89, %93 : vector<16x16xf32>
    %95 = vector.broadcast %29 : vector<1x128xf32> to vector<16x128xf32>
    %96 = arith.mulf %71, %95 : vector<16x128xf32>
    %cst_38 = arith.constant dense<0.000000e+00> : vector<16x128xf32>
    %97 = tpu.matmul %94, %96, %cst_38 {dimension_numbers = #tpu.dot_dimension_numbers<[1], [0], [0], [1], [0, 0, 1, 1], [], []>} : vector<16x16xf32>, vector<16x128xf32>, vector<16x128xf32> -> vector<16x128xf32>
    %98 = arith.addf %84, %97 : vector<16x128xf32>
    %99 = vector.broadcast %37 : vector<1x128xf32> to vector<16x128xf32>
    %100 = arith.mulf %70, %99 : vector<16x128xf32>
    %cst_39 = arith.constant dense<0.000000e+00> : vector<16x16xf32>
    %101 = tpu.matmul %65, %100, %cst_39 {dimension_numbers = #tpu.dot_dimension_numbers<[1], [1], [0], [0], [0, 0, 1, 0], [], []>} : vector<16x128xf32>, vector<16x128xf32>, vector<16x16xf32> -> vector<16x16xf32>
    %102 = arith.addf %101, %11 : vector<16x16xf32>
    %103 = math.exp %102 : vector<16x16xf32>
    %cst_40 = arith.constant dense<0.000000e+00> : vector<16xf32>
    %104 = vector.multi_reduction <add>, %103, %cst_40 [1] : vector<16x16xf32> to vector<16xf32>
    %105 = vector.shape_cast %104 : vector<16xf32> to vector<16x1xf32>
    %106 = tpu.reciprocal %105 {approx = true} : vector<16x1xf32> -> vector<16x1xf32>
    %107 = vector.broadcast %106 : vector<16x1xf32> to vector<16x16xf32>
    %108 = arith.mulf %103, %107 : vector<16x16xf32>
    %109 = vector.broadcast %37 : vector<1x128xf32> to vector<16x128xf32>
    %110 = arith.mulf %71, %109 : vector<16x128xf32>
    %cst_41 = arith.constant dense<0.000000e+00> : vector<16x128xf32>
    %111 = tpu.matmul %108, %110, %cst_41 {dimension_numbers = #tpu.dot_dimension_numbers<[1], [0], [0], [1], [0, 0, 1, 1], [], []>} : vector<16x16xf32>, vector<16x128xf32>, vector<16x128xf32> -> vector<16x128xf32>
    %112 = arith.addf %98, %111 : vector<16x128xf32>
    %113 = vector.broadcast %45 : vector<1x128xf32> to vector<16x128xf32>
    %114 = arith.mulf %70, %113 : vector<16x128xf32>
    %cst_42 = arith.constant dense<0.000000e+00> : vector<16x16xf32>
    %115 = tpu.matmul %65, %114, %cst_42 {dimension_numbers = #tpu.dot_dimension_numbers<[1], [1], [0], [0], [0, 0, 1, 0], [], []>} : vector<16x128xf32>, vector<16x128xf32>, vector<16x16xf32> -> vector<16x16xf32>
    %116 = arith.addf %115, %11 : vector<16x16xf32>
    %117 = math.exp %116 : vector<16x16xf32>
    %cst_43 = arith.constant dense<0.000000e+00> : vector<16xf32>
    %118 = vector.multi_reduction <add>, %117, %cst_43 [1] : vector<16x16xf32> to vector<16xf32>
    %119 = vector.shape_cast %118 : vector<16xf32> to vector<16x1xf32>
    %120 = tpu.reciprocal %119 {approx = true} : vector<16x1xf32> -> vector<16x1xf32>
    %121 = vector.broadcast %120 : vector<16x1xf32> to vector<16x16xf32>
    %122 = arith.mulf %117, %121 : vector<16x16xf32>
    %123 = vector.broadcast %45 : vector<1x128xf32> to vector<16x128xf32>
    %124 = arith.mulf %71, %123 : vector<16x128xf32>
    %cst_44 = arith.constant dense<0.000000e+00> : vector<16x128xf32>
    %125 = tpu.matmul %122, %124, %cst_44 {dimension_numbers = #tpu.dot_dimension_numbers<[1], [0], [0], [1], [0, 0, 1, 1], [], []>} : vector<16x16xf32>, vector<16x128xf32>, vector<16x128xf32> -> vector<16x128xf32>
    %126 = arith.addf %112, %125 : vector<16x128xf32>
    %cst_45 = arith.constant dense<0.000000e+00> : vector<16x32xf32>
    %127 = tpu.matmul %126, %48, %cst_45 {dimension_numbers = #tpu.dot_dimension_numbers<[1], [0], [0], [1], [0, 0, 1, 1], [], []>} : vector<16x128xf32>, vector<128x32xf32>, vector<16x32xf32> -> vector<16x32xf32>
    %128 = arith.addf %8, %127 : vector<16x32xf32>
    %129 = arith.mulf %128, %128 : vector<16x32xf32>
    %cst_46 = arith.constant dense<0.000000e+00> : vector<16xf32>
    %130 = vector.multi_reduction <add>, %129, %cst_46 [1] : vector<16x32xf32> to vector<16xf32>
    %131 = vector.shape_cast %130 : vector<16xf32> to vector<16x1xf32>
    %cst_47 = arith.constant 3.200000e+01 : f32
    %132 = vector.broadcast %cst_47 : f32 to vector<16x1xf32>
    %133 = arith.divf %131, %132 : vector<16x1xf32>
    %cst_48 = arith.constant 9.99999974E-6 : f32
    %134 = vector.broadcast %cst_48 : f32 to vector<16x1xf32>
    %135 = arith.addf %133, %134 : vector<16x1xf32>
    %136 = math.rsqrt %135 : vector<16x1xf32>
    %137 = vector.broadcast %136 : vector<16x1xf32> to vector<16x32xf32>
    %138 = arith.mulf %128, %137 : vector<16x32xf32>
    %cst_49 = arith.constant dense<0.000000e+00> : vector<16x128xf32>
    %139 = tpu.matmul %138, %47, %cst_49 {dimension_numbers = #tpu.dot_dimension_numbers<[1], [0], [0], [1], [0, 0, 1, 1], [], []>} : vector<16x32xf32>, vector<32x128xf32>, vector<16x128xf32> -> vector<16x128xf32>
    %cst_50 = arith.constant 5.000000e-01 : f32
    %140 = vector.broadcast %cst_50 : f32 to vector<16x128xf32>
    %141 = arith.mulf %140, %139 : vector<16x128xf32>
    %cst_51 = arith.constant 0.707106769 : f32
    %142 = vector.broadcast %cst_51 : f32 to vector<16x128xf32>
    %143 = arith.mulf %139, %142 : vector<16x128xf32>
    %cst_52 = arith.constant 0.000000e+00 : f32
    %144 = vector.broadcast %cst_52 : f32 to vector<16x128xf32>
    %145 = arith.cmpf oge, %143, %144 : vector<16x128xf32>
    %cst_53 = arith.constant 1.000000e+00 : f32
    %cst_54 = arith.constant -1.000000e+00 : f32
    %146 = vector.broadcast %cst_53 : f32 to vector<16x128xf32>
    %147 = vector.broadcast %cst_54 : f32 to vector<16x128xf32>
    %148 = arith.select %145, %146, %147 : vector<16x128xi1>, vector<16x128xf32>
    %149 = math.absf %143 : vector<16x128xf32>
    %cst_55 = arith.constant 0.327591091 : f32
    %150 = vector.broadcast %cst_55 : f32 to vector<16x128xf32>
    %151 = arith.mulf %150, %149 : vector<16x128xf32>
    %cst_56 = arith.constant 1.000000e+00 : f32
    %152 = vector.broadcast %cst_56 : f32 to vector<16x128xf32>
    %153 = arith.addf %152, %151 : vector<16x128xf32>
    %cst_57 = arith.constant 1.000000e+00 : f32
    %154 = vector.broadcast %cst_57 : f32 to vector<16x128xf32>
    %155 = arith.divf %154, %153 : vector<16x128xf32>
    %cst_58 = arith.constant 1.06140542 : f32
    %156 = vector.broadcast %cst_58 : f32 to vector<16x128xf32>
    %157 = arith.mulf %156, %155 : vector<16x128xf32>
    %cst_59 = arith.constant -1.45315206 : f32
    %158 = vector.broadcast %cst_59 : f32 to vector<16x128xf32>
    %159 = arith.addf %157, %158 : vector<16x128xf32>
    %160 = arith.mulf %159, %155 : vector<16x128xf32>
    %cst_60 = arith.constant 1.42141378 : f32
    %161 = vector.broadcast %cst_60 : f32 to vector<16x128xf32>
    %162 = arith.addf %160, %161 : vector<16x128xf32>
    %163 = arith.mulf %162, %155 : vector<16x128xf32>
    %cst_61 = arith.constant -0.284496725 : f32
    %164 = vector.broadcast %cst_61 : f32 to vector<16x128xf32>
    %165 = arith.addf %163, %164 : vector<16x128xf32>
    %166 = arith.mulf %165, %155 : vector<16x128xf32>
    %cst_62 = arith.constant 0.254829586 : f32
    %167 = vector.broadcast %cst_62 : f32 to vector<16x128xf32>
    %168 = arith.addf %166, %167 : vector<16x128xf32>
    %169 = arith.mulf %168, %155 : vector<16x128xf32>
    %cst_63 = arith.constant 0.000000e+00 : f32
    %170 = vector.broadcast %cst_63 : f32 to vector<16x128xf32>
    %171 = arith.subf %170, %149 : vector<16x128xf32>
    %172 = arith.mulf %171, %149 : vector<16x128xf32>
    %173 = math.exp %172 : vector<16x128xf32>
    %174 = arith.mulf %169, %173 : vector<16x128xf32>
    %cst_64 = arith.constant 1.000000e+00 : f32
    %175 = vector.broadcast %cst_64 : f32 to vector<16x128xf32>
    %176 = arith.subf %175, %174 : vector<16x128xf32>
    %177 = arith.mulf %148, %176 : vector<16x128xf32>
    %cst_65 = arith.constant 1.000000e+00 : f32
    %178 = vector.broadcast %cst_65 : f32 to vector<16x128xf32>
    %179 = arith.addf %178, %177 : vector<16x128xf32>
    %180 = arith.mulf %141, %179 : vector<16x128xf32>
    %cst_66 = arith.constant dense<0.000000e+00> : vector<16x32xf32>
    %181 = tpu.matmul %180, %49, %cst_66 {dimension_numbers = #tpu.dot_dimension_numbers<[1], [0], [0], [1], [0, 0, 1, 1], [], []>} : vector<16x128xf32>, vector<128x32xf32>, vector<16x32xf32> -> vector<16x32xf32>
    %182 = arith.addf %128, %181 : vector<16x32xf32>
    %c32 = arith.constant 32 : index
    %c0_67 = arith.constant 0 : index
    %183 = vector.load %arg2[%c32, %c0_67] : memref<64x640xf32, #tpu.memory_space<vmem>>, vector<32x640xf32>
    %c32_68 = arith.constant 32 : index
    %c0_69 = arith.constant 0 : index
    %184 = vector.load %arg3[%c32_68, %c0_69] : memref<64x128xf32, #tpu.memory_space<vmem>>, vector<32x128xf32>
    %c512 = arith.constant 512 : index
    %c0_70 = arith.constant 0 : index
    %185 = vector.load %arg4[%c512, %c0_70] : memref<768x32xf32, #tpu.memory_space<vmem>>, vector<128x32xf32>
    %c640 = arith.constant 640 : index
    %c0_71 = arith.constant 0 : index
    %186 = vector.load %arg4[%c640, %c0_71] : memref<768x32xf32, #tpu.memory_space<vmem>>, vector<128x32xf32>
    %187 = arith.mulf %182, %182 : vector<16x32xf32>
    %cst_72 = arith.constant dense<0.000000e+00> : vector<16xf32>
    %188 = vector.multi_reduction <add>, %187, %cst_72 [1] : vector<16x32xf32> to vector<16xf32>
    %189 = vector.shape_cast %188 : vector<16xf32> to vector<16x1xf32>
    %cst_73 = arith.constant 3.200000e+01 : f32
    %190 = vector.broadcast %cst_73 : f32 to vector<16x1xf32>
    %191 = arith.divf %189, %190 : vector<16x1xf32>
    %cst_74 = arith.constant 9.99999974E-6 : f32
    %192 = vector.broadcast %cst_74 : f32 to vector<16x1xf32>
    %193 = arith.addf %191, %192 : vector<16x1xf32>
    %194 = math.rsqrt %193 : vector<16x1xf32>
    %195 = vector.broadcast %194 : vector<16x1xf32> to vector<16x32xf32>
    %196 = arith.mulf %182, %195 : vector<16x32xf32>
    %cst_75 = arith.constant dense<0.000000e+00> : vector<16x640xf32>
    %197 = tpu.matmul %196, %183, %cst_75 {dimension_numbers = #tpu.dot_dimension_numbers<[1], [0], [0], [1], [0, 0, 1, 1], [], []>} : vector<16x32xf32>, vector<32x640xf32>, vector<16x640xf32> -> vector<16x640xf32>
    %198 = vector.extract_strided_slice %197 {offsets = [0, 0], sizes = [16, 128], strides = [1, 1]} : vector<16x640xf32> to vector<16x128xf32>
    %199 = arith.mulf %198, %9 : vector<16x128xf32>
    %200 = vector.extract_strided_slice %197 {offsets = [0, 384], sizes = [16, 128], strides = [1, 1]} : vector<16x640xf32> to vector<16x128xf32>
    %201 = arith.mulf %200, %10 : vector<16x128xf32>
    %202 = arith.addf %199, %201 : vector<16x128xf32>
    %203 = vector.extract_strided_slice %197 {offsets = [0, 128], sizes = [16, 128], strides = [1, 1]} : vector<16x640xf32> to vector<16x128xf32>
    %204 = arith.mulf %203, %9 : vector<16x128xf32>
    %205 = vector.extract_strided_slice %197 {offsets = [0, 512], sizes = [16, 128], strides = [1, 1]} : vector<16x640xf32> to vector<16x128xf32>
    %206 = arith.mulf %205, %10 : vector<16x128xf32>
    %207 = arith.addf %204, %206 : vector<16x128xf32>
    %208 = vector.extract_strided_slice %197 {offsets = [0, 256], sizes = [16, 128], strides = [1, 1]} : vector<16x640xf32> to vector<16x128xf32>
    %209 = vector.broadcast %21 : vector<1x128xf32> to vector<16x128xf32>
    %210 = arith.mulf %207, %209 : vector<16x128xf32>
    %cst_76 = arith.constant dense<0.000000e+00> : vector<16x16xf32>
    %211 = tpu.matmul %202, %210, %cst_76 {dimension_numbers = #tpu.dot_dimension_numbers<[1], [1], [0], [0], [0, 0, 1, 0], [], []>} : vector<16x128xf32>, vector<16x128xf32>, vector<16x16xf32> -> vector<16x16xf32>
    %212 = arith.addf %211, %11 : vector<16x16xf32>
    %213 = math.exp %212 : vector<16x16xf32>
    %cst_77 = arith.constant dense<0.000000e+00> : vector<16xf32>
    %214 = vector.multi_reduction <add>, %213, %cst_77 [1] : vector<16x16xf32> to vector<16xf32>
    %215 = vector.shape_cast %214 : vector<16xf32> to vector<16x1xf32>
    %216 = tpu.reciprocal %215 {approx = true} : vector<16x1xf32> -> vector<16x1xf32>
    %217 = vector.broadcast %216 : vector<16x1xf32> to vector<16x16xf32>
    %218 = arith.mulf %213, %217 : vector<16x16xf32>
    %219 = vector.broadcast %21 : vector<1x128xf32> to vector<16x128xf32>
    %220 = arith.mulf %208, %219 : vector<16x128xf32>
    %cst_78 = arith.constant dense<0.000000e+00> : vector<16x128xf32>
    %221 = tpu.matmul %218, %220, %cst_78 {dimension_numbers = #tpu.dot_dimension_numbers<[1], [0], [0], [1], [0, 0, 1, 1], [], []>} : vector<16x16xf32>, vector<16x128xf32>, vector<16x128xf32> -> vector<16x128xf32>
    %222 = vector.broadcast %29 : vector<1x128xf32> to vector<16x128xf32>
    %223 = arith.mulf %207, %222 : vector<16x128xf32>
    %cst_79 = arith.constant dense<0.000000e+00> : vector<16x16xf32>
    %224 = tpu.matmul %202, %223, %cst_79 {dimension_numbers = #tpu.dot_dimension_numbers<[1], [1], [0], [0], [0, 0, 1, 0], [], []>} : vector<16x128xf32>, vector<16x128xf32>, vector<16x16xf32> -> vector<16x16xf32>
    %225 = arith.addf %224, %11 : vector<16x16xf32>
    %226 = math.exp %225 : vector<16x16xf32>
    %cst_80 = arith.constant dense<0.000000e+00> : vector<16xf32>
    %227 = vector.multi_reduction <add>, %226, %cst_80 [1] : vector<16x16xf32> to vector<16xf32>
    %228 = vector.shape_cast %227 : vector<16xf32> to vector<16x1xf32>
    %229 = tpu.reciprocal %228 {approx = true} : vector<16x1xf32> -> vector<16x1xf32>
    %230 = vector.broadcast %229 : vector<16x1xf32> to vector<16x16xf32>
    %231 = arith.mulf %226, %230 : vector<16x16xf32>
    %232 = vector.broadcast %29 : vector<1x128xf32> to vector<16x128xf32>
    %233 = arith.mulf %208, %232 : vector<16x128xf32>
    %cst_81 = arith.constant dense<0.000000e+00> : vector<16x128xf32>
    %234 = tpu.matmul %231, %233, %cst_81 {dimension_numbers = #tpu.dot_dimension_numbers<[1], [0], [0], [1], [0, 0, 1, 1], [], []>} : vector<16x16xf32>, vector<16x128xf32>, vector<16x128xf32> -> vector<16x128xf32>
    %235 = arith.addf %221, %234 : vector<16x128xf32>
    %236 = vector.broadcast %37 : vector<1x128xf32> to vector<16x128xf32>
    %237 = arith.mulf %207, %236 : vector<16x128xf32>
    %cst_82 = arith.constant dense<0.000000e+00> : vector<16x16xf32>
    %238 = tpu.matmul %202, %237, %cst_82 {dimension_numbers = #tpu.dot_dimension_numbers<[1], [1], [0], [0], [0, 0, 1, 0], [], []>} : vector<16x128xf32>, vector<16x128xf32>, vector<16x16xf32> -> vector<16x16xf32>
    %239 = arith.addf %238, %11 : vector<16x16xf32>
    %240 = math.exp %239 : vector<16x16xf32>
    %cst_83 = arith.constant dense<0.000000e+00> : vector<16xf32>
    %241 = vector.multi_reduction <add>, %240, %cst_83 [1] : vector<16x16xf32> to vector<16xf32>
    %242 = vector.shape_cast %241 : vector<16xf32> to vector<16x1xf32>
    %243 = tpu.reciprocal %242 {approx = true} : vector<16x1xf32> -> vector<16x1xf32>
    %244 = vector.broadcast %243 : vector<16x1xf32> to vector<16x16xf32>
    %245 = arith.mulf %240, %244 : vector<16x16xf32>
    %246 = vector.broadcast %37 : vector<1x128xf32> to vector<16x128xf32>
    %247 = arith.mulf %208, %246 : vector<16x128xf32>
    %cst_84 = arith.constant dense<0.000000e+00> : vector<16x128xf32>
    %248 = tpu.matmul %245, %247, %cst_84 {dimension_numbers = #tpu.dot_dimension_numbers<[1], [0], [0], [1], [0, 0, 1, 1], [], []>} : vector<16x16xf32>, vector<16x128xf32>, vector<16x128xf32> -> vector<16x128xf32>
    %249 = arith.addf %235, %248 : vector<16x128xf32>
    %250 = vector.broadcast %45 : vector<1x128xf32> to vector<16x128xf32>
    %251 = arith.mulf %207, %250 : vector<16x128xf32>
    %cst_85 = arith.constant dense<0.000000e+00> : vector<16x16xf32>
    %252 = tpu.matmul %202, %251, %cst_85 {dimension_numbers = #tpu.dot_dimension_numbers<[1], [1], [0], [0], [0, 0, 1, 0], [], []>} : vector<16x128xf32>, vector<16x128xf32>, vector<16x16xf32> -> vector<16x16xf32>
    %253 = arith.addf %252, %11 : vector<16x16xf32>
    %254 = math.exp %253 : vector<16x16xf32>
    %cst_86 = arith.constant dense<0.000000e+00> : vector<16xf32>
    %255 = vector.multi_reduction <add>, %254, %cst_86 [1] : vector<16x16xf32> to vector<16xf32>
    %256 = vector.shape_cast %255 : vector<16xf32> to vector<16x1xf32>
    %257 = tpu.reciprocal %256 {approx = true} : vector<16x1xf32> -> vector<16x1xf32>
    %258 = vector.broadcast %257 : vector<16x1xf32> to vector<16x16xf32>
    %259 = arith.mulf %254, %258 : vector<16x16xf32>
    %260 = vector.broadcast %45 : vector<1x128xf32> to vector<16x128xf32>
    %261 = arith.mulf %208, %260 : vector<16x128xf32>
    %cst_87 = arith.constant dense<0.000000e+00> : vector<16x128xf32>
    %262 = tpu.matmul %259, %261, %cst_87 {dimension_numbers = #tpu.dot_dimension_numbers<[1], [0], [0], [1], [0, 0, 1, 1], [], []>} : vector<16x16xf32>, vector<16x128xf32>, vector<16x128xf32> -> vector<16x128xf32>
    %263 = arith.addf %249, %262 : vector<16x128xf32>
    %cst_88 = arith.constant dense<0.000000e+00> : vector<16x32xf32>
    %264 = tpu.matmul %263, %185, %cst_88 {dimension_numbers = #tpu.dot_dimension_numbers<[1], [0], [0], [1], [0, 0, 1, 1], [], []>} : vector<16x128xf32>, vector<128x32xf32>, vector<16x32xf32> -> vector<16x32xf32>
    %265 = arith.addf %182, %264 : vector<16x32xf32>
    %266 = arith.mulf %265, %265 : vector<16x32xf32>
    %cst_89 = arith.constant dense<0.000000e+00> : vector<16xf32>
    %267 = vector.multi_reduction <add>, %266, %cst_89 [1] : vector<16x32xf32> to vector<16xf32>
    %268 = vector.shape_cast %267 : vector<16xf32> to vector<16x1xf32>
    %cst_90 = arith.constant 3.200000e+01 : f32
    %269 = vector.broadcast %cst_90 : f32 to vector<16x1xf32>
    %270 = arith.divf %268, %269 : vector<16x1xf32>
    %cst_91 = arith.constant 9.99999974E-6 : f32
    %271 = vector.broadcast %cst_91 : f32 to vector<16x1xf32>
    %272 = arith.addf %270, %271 : vector<16x1xf32>
    %273 = math.rsqrt %272 : vector<16x1xf32>
    %274 = vector.broadcast %273 : vector<16x1xf32> to vector<16x32xf32>
    %275 = arith.mulf %265, %274 : vector<16x32xf32>
    %cst_92 = arith.constant dense<0.000000e+00> : vector<16x128xf32>
    %276 = tpu.matmul %275, %184, %cst_92 {dimension_numbers = #tpu.dot_dimension_numbers<[1], [0], [0], [1], [0, 0, 1, 1], [], []>} : vector<16x32xf32>, vector<32x128xf32>, vector<16x128xf32> -> vector<16x128xf32>
    %cst_93 = arith.constant 5.000000e-01 : f32
    %277 = vector.broadcast %cst_93 : f32 to vector<16x128xf32>
    %278 = arith.mulf %277, %276 : vector<16x128xf32>
    %cst_94 = arith.constant 0.707106769 : f32
    %279 = vector.broadcast %cst_94 : f32 to vector<16x128xf32>
    %280 = arith.mulf %276, %279 : vector<16x128xf32>
    %cst_95 = arith.constant 0.000000e+00 : f32
    %281 = vector.broadcast %cst_95 : f32 to vector<16x128xf32>
    %282 = arith.cmpf oge, %280, %281 : vector<16x128xf32>
    %cst_96 = arith.constant 1.000000e+00 : f32
    %cst_97 = arith.constant -1.000000e+00 : f32
    %283 = vector.broadcast %cst_96 : f32 to vector<16x128xf32>
    %284 = vector.broadcast %cst_97 : f32 to vector<16x128xf32>
    %285 = arith.select %282, %283, %284 : vector<16x128xi1>, vector<16x128xf32>
    %286 = math.absf %280 : vector<16x128xf32>
    %cst_98 = arith.constant 0.327591091 : f32
    %287 = vector.broadcast %cst_98 : f32 to vector<16x128xf32>
    %288 = arith.mulf %287, %286 : vector<16x128xf32>
    %cst_99 = arith.constant 1.000000e+00 : f32
    %289 = vector.broadcast %cst_99 : f32 to vector<16x128xf32>
    %290 = arith.addf %289, %288 : vector<16x128xf32>
    %cst_100 = arith.constant 1.000000e+00 : f32
    %291 = vector.broadcast %cst_100 : f32 to vector<16x128xf32>
    %292 = arith.divf %291, %290 : vector<16x128xf32>
    %cst_101 = arith.constant 1.06140542 : f32
    %293 = vector.broadcast %cst_101 : f32 to vector<16x128xf32>
    %294 = arith.mulf %293, %292 : vector<16x128xf32>
    %cst_102 = arith.constant -1.45315206 : f32
    %295 = vector.broadcast %cst_102 : f32 to vector<16x128xf32>
    %296 = arith.addf %294, %295 : vector<16x128xf32>
    %297 = arith.mulf %296, %292 : vector<16x128xf32>
    %cst_103 = arith.constant 1.42141378 : f32
    %298 = vector.broadcast %cst_103 : f32 to vector<16x128xf32>
    %299 = arith.addf %297, %298 : vector<16x128xf32>
    %300 = arith.mulf %299, %292 : vector<16x128xf32>
    %cst_104 = arith.constant -0.284496725 : f32
    %301 = vector.broadcast %cst_104 : f32 to vector<16x128xf32>
    %302 = arith.addf %300, %301 : vector<16x128xf32>
    %303 = arith.mulf %302, %292 : vector<16x128xf32>
    %cst_105 = arith.constant 0.254829586 : f32
    %304 = vector.broadcast %cst_105 : f32 to vector<16x128xf32>
    %305 = arith.addf %303, %304 : vector<16x128xf32>
    %306 = arith.mulf %305, %292 : vector<16x128xf32>
    %cst_106 = arith.constant 0.000000e+00 : f32
    %307 = vector.broadcast %cst_106 : f32 to vector<16x128xf32>
    %308 = arith.subf %307, %286 : vector<16x128xf32>
    %309 = arith.mulf %308, %286 : vector<16x128xf32>
    %310 = math.exp %309 : vector<16x128xf32>
    %311 = arith.mulf %306, %310 : vector<16x128xf32>
    %cst_107 = arith.constant 1.000000e+00 : f32
    %312 = vector.broadcast %cst_107 : f32 to vector<16x128xf32>
    %313 = arith.subf %312, %311 : vector<16x128xf32>
    %314 = arith.mulf %285, %313 : vector<16x128xf32>
    %cst_108 = arith.constant 1.000000e+00 : f32
    %315 = vector.broadcast %cst_108 : f32 to vector<16x128xf32>
    %316 = arith.addf %315, %314 : vector<16x128xf32>
    %317 = arith.mulf %278, %316 : vector<16x128xf32>
    %cst_109 = arith.constant dense<0.000000e+00> : vector<16x32xf32>
    %318 = tpu.matmul %317, %186, %cst_109 {dimension_numbers = #tpu.dot_dimension_numbers<[1], [0], [0], [1], [0, 0, 1, 1], [], []>} : vector<16x128xf32>, vector<128x32xf32>, vector<16x32xf32> -> vector<16x32xf32>
    %319 = arith.addf %265, %318 : vector<16x32xf32>
    %cst_110 = arith.constant dense<0.000000e+00> : vector<2x32xf32>
    %320 = tpu.matmul %12, %319, %cst_110 {dimension_numbers = #tpu.dot_dimension_numbers<[1], [0], [0], [1], [0, 0, 1, 1], [], []>} : vector<2x16xf32>, vector<16x32xf32>, vector<2x32xf32> -> vector<2x32xf32>
    %321 = arith.mulf %320, %320 : vector<2x32xf32>
    %cst_111 = arith.constant dense<0.000000e+00> : vector<2xf32>
    %322 = vector.multi_reduction <add>, %321, %cst_111 [1] : vector<2x32xf32> to vector<2xf32>
    %323 = vector.shape_cast %322 : vector<2xf32> to vector<2x1xf32>
    %cst_112 = arith.constant 3.200000e+01 : f32
    %324 = vector.broadcast %cst_112 : f32 to vector<2x1xf32>
    %325 = arith.divf %323, %324 : vector<2x1xf32>
    %cst_113 = arith.constant 9.99999974E-6 : f32
    %326 = vector.broadcast %cst_113 : f32 to vector<2x1xf32>
    %327 = arith.addf %325, %326 : vector<2x1xf32>
    %328 = math.rsqrt %327 : vector<2x1xf32>
    %329 = vector.broadcast %328 : vector<2x1xf32> to vector<2x32xf32>
    %330 = arith.mulf %320, %329 : vector<2x32xf32>
    %c0_114 = arith.constant 0 : index
    %c0_115 = arith.constant 0 : index
    %331 = vector.load %arg5[%c0_114, %c0_115] : memref<32x256xf32, #tpu.memory_space<vmem>>, vector<32x256xf32>
    %cst_116 = arith.constant dense<0.000000e+00> : vector<2x256xf32>
    %332 = tpu.matmul %330, %331, %cst_116 {dimension_numbers = #tpu.dot_dimension_numbers<[1], [0], [0], [1], [0, 0, 1, 1], [], []>} : vector<2x32xf32>, vector<32x256xf32>, vector<2x256xf32> -> vector<2x256xf32>
    %c0_117 = arith.constant 0 : index
    %c0_118 = arith.constant 0 : index
    %333 = vector.load %arg6[%c0_117, %c0_118] : memref<2x256xf32, #tpu.memory_space<vmem>>, vector<2x256xf32>
    tpu.vector_store %arg6[%c0_117, %c0_118], %332 {strides = array<i32>} : memref<2x256xf32, #tpu.memory_space<vmem>>, vector<2x256xf32>,
    return
  }
}

</mosaic_0001>

<llo_original>
// kernel: gpt_forward.1
$region0: #{gpt_forward.1}
  #allocation0 [shape = 'u32[]', space=smem, size = 0x4, offset = 0x4, fixed_abs, tag = 'smem constant byte address 0x4 - core index']
  #allocation1 [shape = 'u32[72,128]{1,0:T(1,128)}', space=vmem, size = 0x9000, scoped, tag = 'internal scratch']
  %s0 = inlined_call_operand.vmem [shape: s32[16,1], index: 0, kind: input, shape index: {}]
  %s1 = inlined_call_operand.vmem [shape: f32[16,512], index: 1, kind: input, shape index: {}]
  %s2 = inlined_call_operand.vmem [shape: f32[64,640], index: 2, kind: input, shape index: {}]
  %s3 = inlined_call_operand.vmem [shape: f32[64,128], index: 3, kind: input, shape index: {}]
  %s4 = inlined_call_operand.vmem [shape: f32[768,32], index: 4, kind: input, shape index: {}]
  %s5 = inlined_call_operand.vmem [shape: f32[32,256], index: 5, kind: input, shape index: {}]
  %s6 = inlined_call_operand.vmem [shape: f32[2,256], index: 6, kind: output, shape index: {}]
  %s7 = sld [smem:[#allocation0]]
  $region34: #{gpt_forward.1} parent=0
    _
  %s9 = ssub.s32 1, %s7
  %s10 = scalar_select 0, %s9, %s7
  // Predicated region
  $region2: #{gpt_forward.1} parent=0 // pred_check
    _
  $region3: #{gpt_forward.1} parent=0 // pred_check_branch
    %12 = sbr.rel (0) target = $region5
  $region4: #{gpt_forward.1} parent=0 // pred_region
    _
  $region5: #{gpt_forward.1} parent=0 // pred_fallthru
    _
  // Predicated region
  $region6: #{gpt_forward.1} parent=0 // pred_check
    _
  $region7: #{gpt_forward.1} parent=0 // pred_check_branch
    %14 = sbr.rel (0) target = $region9
  $region8: #{gpt_forward.1} parent=0 // pred_region
    _
  $region9: #{gpt_forward.1} parent=0 // pred_fallthru
    _
  // Predicated region
  $region10: #{gpt_forward.1} parent=0 // pred_check
    _
  $region11: #{gpt_forward.1} parent=0 // pred_check_branch
    %16 = sbr.rel (0) target = $region13
  $region12: #{gpt_forward.1} parent=0 // pred_region
    _
  $region13: #{gpt_forward.1} parent=0 // pred_fallthru
    _
  // Predicated region
  $region14: #{gpt_forward.1} parent=0 // pred_check
    _
  $region15: #{gpt_forward.1} parent=0 // pred_check_branch
    %18 = sbr.rel (0) target = $region17
  $region16: #{gpt_forward.1} parent=0 // pred_region
    _
  $region17: #{gpt_forward.1} parent=0 // pred_fallthru
    _
  // Predicated region
  $region18: #{gpt_forward.1} parent=0 // pred_check
    _
  $region19: #{gpt_forward.1} parent=0 // pred_check_branch
    %20 = sbr.rel (0) target = $region21
  $region20: #{gpt_forward.1} parent=0 // pred_region
    _
  $region21: #{gpt_forward.1} parent=0 // pred_fallthru
    _
  // Predicated region
  $region22: #{gpt_forward.1} parent=0 // pred_check
    _
  $region23: #{gpt_forward.1} parent=0 // pred_check_branch
    %22 = sbr.rel (0) target = $region25
  $region24: #{gpt_forward.1} parent=0 // pred_region
    _
  $region25: #{gpt_forward.1} parent=0 // pred_fallthru
    _
  %v23 = vld [vmem:[%s0] sm:$0xff]
  %v24 = vld [vmem:[%s0 + $0x8] sm:$0xff]
  %v25 = vlaneseq
  %v26 = vand.u32 %v25, 127
  %v27 = vadd.s32 %v26, 128
  %28 = vset.pattern.permute.xlu0 0
  %29 = vperm.xlu0 %28, %v23
  %v30 = vpop.permute.xlu0 %29
  %31 = vset.pattern.permute.xlu0 0
  %32 = vperm.xlu0 %31, %v24
  %v33 = vpop.permute.xlu0 %32
  %vm34 = vcmp.eq.s32.totalorder %v26, %v30
  %vm35 = vcmp.eq.s32.totalorder %v27, %v30
  %vm36 = vcmp.eq.s32.totalorder %v26, %v33
  %vm37 = vcmp.eq.s32.totalorder %v27, %v33
  %v38 = vsel %vm34, 1.0, 0.0
  %v39 = vsel %vm35, 1.0, 0.0
  %v40 = vsel %vm36, 1.0, 0.0
  %v41 = vsel %vm37, 1.0, 0.0
  %v42 = vld [vmem:[%s4] sm:$0xff]
  %v43 = vld [vmem:[%s4 + $0x8] sm:$0xff]
  %v44 = vld [vmem:[%s4 + $0x10] sm:$0xff]
  %v45 = vld [vmem:[%s4 + $0x18] sm:$0xff]
  %v46 = vld [vmem:[%s4 + $0x20] sm:$0xff]
  %v47 = vld [vmem:[%s4 + $0x28] sm:$0xff]
  %v48 = vld [vmem:[%s4 + $0x30] sm:$0xff]
  %v49 = vld [vmem:[%s4 + $0x38] sm:$0xff]
  %v50 = vld [vmem:[%s4 + $0x40] sm:$0xff]
  %v51 = vld [vmem:[%s4 + $0x48] sm:$0xff]
  %v52 = vld [vmem:[%s4 + $0x50] sm:$0xff]
  %v53 = vld [vmem:[%s4 + $0x58] sm:$0xff]
  %v54 = vld [vmem:[%s4 + $0x60] sm:$0xff]
  %v55 = vld [vmem:[%s4 + $0x68] sm:$0xff]
  %v56 = vld [vmem:[%s4 + $0x70] sm:$0xff]
  %v57 = vld [vmem:[%s4 + $0x78] sm:$0xff]
  %v58 = vld [vmem:[%s4 + $0x80] sm:$0xff]
  %v59 = vld [vmem:[%s4 + $0x88] sm:$0xff]
  %v60 = vld [vmem:[%s4 + $0x90] sm:$0xff]
  %v61 = vld [vmem:[%s4 + $0x98] sm:$0xff]
  %v62 = vld [vmem:[%s4 + $0xa0] sm:$0xff]
  %v63 = vld [vmem:[%s4 + $0xa8] sm:$0xff]
  %v64 = vld [vmem:[%s4 + $0xb0] sm:$0xff]
  %v65 = vld [vmem:[%s4 + $0xb8] sm:$0xff]
  %v66 = vld [vmem:[%s4 + $0xc0] sm:$0xff]
  %v67 = vld [vmem:[%s4 + $0xc8] sm:$0xff]
  %v68 = vld [vmem:[%s4 + $0xd0] sm:$0xff]
  %v69 = vld [vmem:[%s4 + $0xd8] sm:$0xff]
  %v70 = vld [vmem:[%s4 + $0xe0] sm:$0xff]
  %v71 = vld [vmem:[%s4 + $0xe8] sm:$0xff]
  %v72 = vld [vmem:[%s4 + $0xf0] sm:$0xff]
  %v73 = vld [vmem:[%s4 + $0xf8] sm:$0xff]
  %74 = vmatpush.msra.mxu0 %v57
  %75 = vmatpush.msra.mxu0 %v56
  %76 = vmatpush.msra.mxu0 %v55
  %77 = vmatpush.msra.mxu0 %v54
  %78 = vmatpush.msra.mxu0 %v53
  %79 = vmatpush.msra.mxu0 %v52
  %80 = vmatpush.msra.mxu0 %v51
  %81 = vmatpush.msra.mxu0 %v50
  %82 = vmatpush.msra.mxu0 %v49
  %83 = vmatpush.msra.mxu0 %v48
  %84 = vmatpush.msra.mxu0 %v47
  %85 = vmatpush.msra.mxu0 %v46
  %86 = vmatpush.msra.mxu0 %v45
  %87 = vmatpush.msra.mxu0 %v44
  %88 = vmatpush.msra.mxu0 %v43
  %89 = vmatpush.msra.mxu0 %v42
  %90 = vmatmul.f32.gmra.mxu0 %v38
  %v91 = vpop.f32.mrf.mxu0
  %v92 = vadd.f32 0.0, %v91
  %93 = vmatmul.f32.gmra.mxu0 %v40
  %v94 = vpop.f32.mrf.mxu0
  %v95 = vadd.f32 0.0, %v94
  %96 = vdwg.mxu0
  %97 = vmatpush.msra.mxu0 %v73
  %98 = vmatpush.msra.mxu0 %v72
  %99 = vmatpush.msra.mxu0 %v71
  %100 = vmatpush.msra.mxu0 %v70
  %101 = vmatpush.msra.mxu0 %v69
  %102 = vmatpush.msra.mxu0 %v68
  %103 = vmatpush.msra.mxu0 %v67
  %104 = vmatpush.msra.mxu0 %v66
  %105 = vmatpush.msra.mxu0 %v65
  %106 = vmatpush.msra.mxu0 %v64
  %107 = vmatpush.msra.mxu0 %v63
  %108 = vmatpush.msra.mxu0 %v62
  %109 = vmatpush.msra.mxu0 %v61
  %110 = vmatpush.msra.mxu0 %v60
  %111 = vmatpush.msra.mxu0 %v59
  %112 = vmatpush.msra.mxu0 %v58
  %113 = vmatmul.f32.gmra.mxu0 %v39
  %v114 = vpop.f32.mrf.mxu0
  %v115 = vadd.f32 %v92, %v114
  %116 = vmatmul.f32.gmra.mxu0 %v41
  %v117 = vpop.f32.mrf.mxu0
  %v118 = vadd.f32 %v95, %v117
  %119 = vdwg.mxu0
  %v120 = vld [vmem:[%s1] sm:$0xff]
  %v121 = vld [vmem:[%s1 + $0x20] sm:$0xff]
  %v122 = vld [vmem:[%s1 + $0x8] sm:$0xff]
  %v123 = vld [vmem:[%s1 + $0x28] sm:$0xff]
  %v124 = vld [vmem:[%s1 + $0x10] sm:$0xff]
  %v125 = vld [vmem:[%s1 + $0x30] sm:$0xff]
  %v126 = vld [vmem:[%s1 + $0x18] sm:$0x3]
  %vm127 = vcmp.ge.s32.totalorder %v26, 0
  %vm128 = vcmp.lt.s32.totalorder %v26, 8
  %vm129 = vmand %vm127, %vm128
  %v130 = vsel %vm129, 1.0, 0.0
  %vm131 = vcmp.ge.s32.totalorder %v26, 8
  %vm132 = vcmp.lt.s32.totalorder %v26, 16
  %vm133 = vmand %vm131, %vm132
  %v134 = vsel %vm133, 1.0, 0.0
  %vm135 = vcmp.ge.s32.totalorder %v26, 16
  %vm136 = vcmp.lt.s32.totalorder %v26, 24
  %vm137 = vmand %vm135, %vm136
  %v138 = vsel %vm137, 1.0, 0.0
  %vm139 = vcmp.ge.s32.totalorder %v26, 24
  %vm140 = vcmp.lt.s32.totalorder %v26, 32
  %vm141 = vmand %vm139, %vm140
  %v142 = vsel %vm141, 1.0, 0.0
  %v143 = vld [vmem:[%s2] sm:$0xff]
  %v144 = vld [vmem:[%s2 + $0x8] sm:$0xff]
  %v145 = vld [vmem:[%s2 + $0x10] sm:$0xff]
  %v146 = vld [vmem:[%s2 + $0x18] sm:$0xff]
  %v147 = vld [vmem:[%s2 + $0x20] sm:$0xff]
  %v148 = vld [vmem:[%s2 + $0x28] sm:$0xff]
  %v149 = vld [vmem:[%s2 + $0x30] sm:$0xff]
  %v150 = vld [vmem:[%s2 + $0x38] sm:$0xff]
  %v151 = vld [vmem:[%s2 + $0x40] sm:$0xff]
  %v152 = vld [vmem:[%s2 + $0x48] sm:$0xff]
  %v153 = vld [vmem:[%s2 + $0x50] sm:$0xff]
  %v154 = vld [vmem:[%s2 + $0x58] sm:$0xff]
  %v155 = vld [vmem:[%s2 + $0x60] sm:$0xff]
  %v156 = vld [vmem:[%s2 + $0x68] sm:$0xff]
  %v157 = vld [vmem:[%s2 + $0x70] sm:$0xff]
  %v158 = vld [vmem:[%s2 + $0x78] sm:$0xff]
  %v159 = vld [vmem:[%s2 + $0x80] sm:$0xff]
  %v160 = vld [vmem:[%s2 + $0x88] sm:$0xff]
  %v161 = vld [vmem:[%s2 + $0x90] sm:$0xff]
  %v162 = vld [vmem:[%s2 + $0x98] sm:$0xff]
  %v163 = vld [vmem:[%s3] sm:$0xff]
  %v164 = vld [vmem:[%s3 + $0x8] sm:$0xff]
  %v165 = vld [vmem:[%s3 + $0x10] sm:$0xff]
  %v166 = vld [vmem:[%s3 + $0x18] sm:$0xff]
  %v167 = vld [vmem:[%s4 + $0x100] sm:$0xff]
  %v168 = vld [vmem:[%s4 + $0x108] sm:$0xff]
  %v169 = vld [vmem:[%s4 + $0x110] sm:$0xff]
  %v170 = vld [vmem:[%s4 + $0x118] sm:$0xff]
  %v171 = vld [vmem:[%s4 + $0x120] sm:$0xff]
  %v172 = vld [vmem:[%s4 + $0x128] sm:$0xff]
  %v173 = vld [vmem:[%s4 + $0x130] sm:$0xff]
  %v174 = vld [vmem:[%s4 + $0x138] sm:$0xff]
  %v175 = vld [vmem:[%s4 + $0x140] sm:$0xff]
  %v176 = vld [vmem:[%s4 + $0x148] sm:$0xff]
  %v177 = vld [vmem:[%s4 + $0x150] sm:$0xff]
  %v178 = vld [vmem:[%s4 + $0x158] sm:$0xff]
  %v179 = vld [vmem:[%s4 + $0x160] sm:$0xff]
  %v180 = vld [vmem:[%s4 + $0x168] sm:$0xff]
  %v181 = vld [vmem:[%s4 + $0x170] sm:$0xff]
  %v182 = vld [vmem:[%s4 + $0x178] sm:$0xff]
  %v183 = vld [vmem:[%s4 + $0x180] sm:$0xff]
  %v184 = vld [vmem:[%s4 + $0x188] sm:$0xff]
  %v185 = vld [vmem:[%s4 + $0x190] sm:$0xff]
  %v186 = vld [vmem:[%s4 + $0x198] sm:$0xff]
  %v187 = vld [vmem:[%s4 + $0x1a0] sm:$0xff]
  %v188 = vld [vmem:[%s4 + $0x1a8] sm:$0xff]
  %v189 = vld [vmem:[%s4 + $0x1b0] sm:$0xff]
  %v190 = vld [vmem:[%s4 + $0x1b8] sm:$0xff]
  %v191 = vld [vmem:[%s4 + $0x1c0] sm:$0xff]
  %v192 = vld [vmem:[%s4 + $0x1c8] sm:$0xff]
  %v193 = vld [vmem:[%s4 + $0x1d0] sm:$0xff]
  %v194 = vld [vmem:[%s4 + $0x1d8] sm:$0xff]
  %v195 = vld [vmem:[%s4 + $0x1e0] sm:$0xff]
  %v196 = vld [vmem:[%s4 + $0x1e8] sm:$0xff]
  %v197 = vld [vmem:[%s4 + $0x1f0] sm:$0xff]
  %v198 = vld [vmem:[%s4 + $0x1f8] sm:$0xff]
  %v199 = vmul.f32 %v115, %v115
  %v200 = vmul.f32 %v118, %v118
  %vm201 = vcmask 261120
  %v202 = vsel %vm201, %v199, 0.0
  %203 = vadd.xlane.f32.xlu0 %v202
  %v204 = vpop.xlane.xlu0 %203
  %v205 = vsel %vm201, %v200, 0.0
  %206 = vadd.xlane.f32.xlu0 %v205
  %v207 = vpop.xlane.xlu0 %206
  %v208 = vrcp.pop 32.0
  %v209 = vmul.f32 32.0, %v208
  %v210 = vsub.f32 1.0, %v209
  %v211 = vmul.f32 %v208, %v210
  %v212 = vadd.f32 %v208, %v211
  %vm213 = vweird.f32 %v208
  %v214 = vsel %vm213, %v208, %v212
  %v215 = vmul.f32 %v204, %v214
  %v216 = vmul.f32 %v207, %v214
  %v217 = vadd.f32 %v215, 1e-05
  %v218 = vadd.f32 %v216, 1e-05
  %v219 = vrsqrt.pop %v217
  %v220 = vmul.f32 %v219, %v217
  %v221 = vmul.f32 %v220, %v219
  %v222 = vmul.f32 0.5, %v221
  %v223 = vsub.f32 1.5, %v222
  %v224 = vmul.f32 %v219, %v223
  %vm225 = vweird.f32 %v217
  %vm226 = vweird.f32 %v219
  %vm227 = vmor %vm225, %vm226
  %v228 = vsel %vm227, %v219, %v224
  %v229 = vrsqrt.pop %v218
  %v230 = vmul.f32 %v229, %v218
  %v231 = vmul.f32 %v230, %v229
  %v232 = vmul.f32 0.5, %v231
  %v233 = vsub.f32 1.5, %v232
  %v234 = vmul.f32 %v229, %v233
  %vm235 = vweird.f32 %v218
  %vm236 = vweird.f32 %v229
  %vm237 = vmor %vm235, %vm236
  %v238 = vsel %vm237, %v229, %v234
  %v239 = vmul.f32 %v115, %v228
  %v240 = vmul.f32 %v118, %v238
  %v242 = vsel %vm201, %v239, 0
  %v245 = vsel %vm201, %v240, 0
  %247 = vmatpush.msra.mxu0 0.0
  %248 = vmatpush.msra.mxu0 0.0
  %249 = vmatpush.msra.mxu0 0.0
  %250 = vmatpush.msra.mxu0 0.0
  %251 = vmatpush.msra.mxu0 0.0
  %252 = vmatpush.msra.mxu0 0.0
  %253 = vmatpush.msra.mxu0 0.0
  %254 = vmatpush.msra.mxu0 0.0
  %255 = vmatpush.msra.mxu0 0.0
  %256 = vmatpush.msra.mxu0 0.0
  %257 = vmatpush.msra.mxu0 0.0
  %258 = vmatpush.msra.mxu0 0.0
  %259 = vmatpush.msra.mxu0 %v158
  %260 = vmatpush.msra.mxu0 %v153
  %261 = vmatpush.msra.mxu0 %v148
  %262 = vmatpush.msra.mxu0 %v143
  %263 = vmatmul.f32.gmra.mxu0 %v242
  %v264 = vpop.f32.mrf.mxu0
  %v265 = vadd.f32 0.0, %v264
  %266 = vmatmul.f32.gmra.mxu0 %v245
  %v267 = vpop.f32.mrf.mxu0
  %v268 = vadd.f32 0.0, %v267
  %269 = vdwg.mxu0
  %270 = vmatpush.msra.mxu0 0.0
  %271 = vmatpush.msra.mxu0 0.0
  %272 = vmatpush.msra.mxu0 0.0
  %273 = vmatpush.msra.mxu0 0.0
  %274 = vmatpush.msra.mxu0 0.0
  %275 = vmatpush.msra.mxu0 0.0
  %276 = vmatpush.msra.mxu0 0.0
  %277 = vmatpush.msra.mxu0 0.0
  %278 = vmatpush.msra.mxu0 0.0
  %279 = vmatpush.msra.mxu0 0.0
  %280 = vmatpush.msra.mxu0 0.0
  %281 = vmatpush.msra.mxu0 0.0
  %282 = vmatpush.msra.mxu0 %v159
  %283 = vmatpush.msra.mxu0 %v154
  %284 = vmatpush.msra.mxu0 %v149
  %285 = vmatpush.msra.mxu0 %v144
  %286 = vmatmul.f32.gmra.mxu0 %v242
  %v287 = vpop.f32.mrf.mxu0
  %v288 = vadd.f32 0.0, %v287
  %289 = vmatmul.f32.gmra.mxu0 %v245
  %v290 = vpop.f32.mrf.mxu0
  %v291 = vadd.f32 0.0, %v290
  %292 = vdwg.mxu0
  %293 = vmatpush.msra.mxu0 0.0
  %294 = vmatpush.msra.mxu0 0.0
  %295 = vmatpush.msra.mxu0 0.0
  %296 = vmatpush.msra.mxu0 0.0
  %297 = vmatpush.msra.mxu0 0.0
  %298 = vmatpush.msra.mxu0 0.0
  %299 = vmatpush.msra.mxu0 0.0
  %300 = vmatpush.msra.mxu0 0.0
  %301 = vmatpush.msra.mxu0 0.0
  %302 = vmatpush.msra.mxu0 0.0
  %303 = vmatpush.msra.mxu0 0.0
  %304 = vmatpush.msra.mxu0 0.0
  %305 = vmatpush.msra.mxu0 %v160
  %306 = vmatpush.msra.mxu0 %v155
  %307 = vmatpush.msra.mxu0 %v150
  %308 = vmatpush.msra.mxu0 %v145
  %309 = vmatmul.f32.gmra.mxu0 %v242
  %v310 = vpop.f32.mrf.mxu0
  %v311 = vadd.f32 0.0, %v310
  %312 = vmatmul.f32.gmra.mxu0 %v245
  %v313 = vpop.f32.mrf.mxu0
  %v314 = vadd.f32 0.0, %v313
  %315 = vdwg.mxu0
  %316 = vmatpush.msra.mxu0 0.0
  %317 = vmatpush.msra.mxu0 0.0
  %318 = vmatpush.msra.mxu0 0.0
  %319 = vmatpush.msra.mxu0 0.0
  %320 = vmatpush.msra.mxu0 0.0
  %321 = vmatpush.msra.mxu0 0.0
  %322 = vmatpush.msra.mxu0 0.0
  %323 = vmatpush.msra.mxu0 0.0
  %324 = vmatpush.msra.mxu0 0.0
  %325 = vmatpush.msra.mxu0 0.0
  %326 = vmatpush.msra.mxu0 0.0
  %327 = vmatpush.msra.mxu0 0.0
  %328 = vmatpush.msra.mxu0 %v161
  %329 = vmatpush.msra.mxu0 %v156
  %330 = vmatpush.msra.mxu0 %v151
  %331 = vmatpush.msra.mxu0 %v146
  %332 = vmatmul.f32.gmra.mxu0 %v242
  %v333 = vpop.f32.mrf.mxu0
  %v334 = vadd.f32 0.0, %v333
  %335 = vmatmul.f32.gmra.mxu0 %v245
  %v336 = vpop.f32.mrf.mxu0
  %v337 = vadd.f32 0.0, %v336
  %338 = vdwg.mxu0
  %339 = vmatpush.msra.mxu0 0.0
  %340 = vmatpush.msra.mxu0 0.0
  %341 = vmatpush.msra.mxu0 0.0
  %342 = vmatpush.msra.mxu0 0.0
  %343 = vmatpush.msra.mxu0 0.0
  %344 = vmatpush.msra.mxu0 0.0
  %345 = vmatpush.msra.mxu0 0.0
  %346 = vmatpush.msra.mxu0 0.0
  %347 = vmatpush.msra.mxu0 0.0
  %348 = vmatpush.msra.mxu0 0.0
  %349 = vmatpush.msra.mxu0 0.0
  %350 = vmatpush.msra.mxu0 0.0
  %351 = vmatpush.msra.mxu0 %v162
  %352 = vmatpush.msra.mxu0 %v157
  %353 = vmatpush.msra.mxu0 %v152
  %354 = vmatpush.msra.mxu0 %v147
  %355 = vmatmul.f32.gmra.mxu0 %v242
  %v356 = vpop.f32.mrf.mxu0
  %v357 = vadd.f32 0.0, %v356
  %358 = vmatmul.f32.gmra.mxu0 %v245
  %v359 = vpop.f32.mrf.mxu0
  %v360 = vadd.f32 0.0, %v359
  %361 = vdwg.mxu0
  %v362 = vmul.f32 %v265, %v120
  %v363 = vmul.f32 %v268, %v121
  %v364 = vmul.f32 %v334, %v122
  %v365 = vmul.f32 %v337, %v123
  %v366 = vadd.f32 %v362, %v364
  %v367 = vadd.f32 %v363, %v365
  %v368 = vmul.f32 %v288, %v120
  %v369 = vmul.f32 %v291, %v121
  %v370 = vmul.f32 %v357, %v122
  %v371 = vmul.f32 %v360, %v123
  %v372 = vadd.f32 %v368, %v370
  %v373 = vadd.f32 %v369, %v371
  %v374 = vmul.f32 %v372, %v130
  %v375 = vmul.f32 %v373, %v130
  %376 = vmatpush.xpose.msra.mxu0 0.0
  %377 = vmatpush.xpose.msra.mxu0 0.0
  %378 = vmatpush.xpose.msra.mxu0 0.0
  %379 = vmatpush.xpose.msra.mxu0 0.0
  %380 = vmatpush.xpose.msra.mxu0 0.0
  %381 = vmatpush.xpose.msra.mxu0 0.0
  %382 = vmatpush.xpose.msra.mxu0 0.0
  %383 = vmatpush.xpose.msra.mxu0 0.0
  %384 = vmatpush.xpose.msra.mxu0 0.0
  %385 = vmatpush.xpose.msra.mxu0 0.0
  %386 = vmatpush.xpose.msra.mxu0 0.0
  %387 = vmatpush.xpose.msra.mxu0 0.0
  %388 = vmatpush.xpose.msra.mxu0 0.0
  %389 = vmatpush.xpose.msra.mxu0 0.0
  %390 = vmatpush.xpose.msra.mxu0 %v375
  %391 = vmatpush.xpose.msra.mxu0 %v374
  %392 = vmatmul.f32.gmra.mxu0 %v366
  %v393 = vpop.f32.mrf.mxu0
  %v394 = vadd.f32 %v124, %v393
  %395 = vmatmul.f32.gmra.mxu0 %v367
  %v396 = vpop.f32.mrf.mxu0
  %v397 = vadd.f32 %v125, %v396
  %398 = vdwg.mxu0
  %v399 = vmul.f32 %v394, 1.442695
  %v400 = vpow.pop %v399
  %v401 = vmul.f32 %v397, 1.442695
  %v402 = vpow.pop %v401
  %vm403 = vcmask 130048
  %v404 = vsel %vm403, %v400, 0.0
  %405 = vadd.xlane.f32.xlu0 %v404
  %v406 = vpop.xlane.xlu0 %405
  %v407 = vsel %vm403, %v402, 0.0
  %408 = vadd.xlane.f32.xlu0 %v407
  %v409 = vpop.xlane.xlu0 %408
  %v410 = vrcp.pop %v406
  %v411 = vrcp.pop %v409
  %v412 = vmul.f32 %v400, %v410
  %v413 = vmul.f32 %v402, %v411
  %v414 = vmul.f32 %v311, %v130
  %v415 = vmul.f32 %v314, %v130
  %v416 = vmul.f32 %v372, %v134
  %v417 = vmul.f32 %v373, %v134
  %418 = vmatpush.xpose.msra.mxu0 0.0
  %419 = vmatpush.xpose.msra.mxu0 0.0
  %420 = vmatpush.xpose.msra.mxu0 0.0
  %421 = vmatpush.xpose.msra.mxu0 0.0
  %422 = vmatpush.xpose.msra.mxu0 0.0
  %423 = vmatpush.xpose.msra.mxu0 0.0
  %424 = vmatpush.xpose.msra.mxu0 0.0
  %425 = vmatpush.xpose.msra.mxu0 0.0
  %426 = vmatpush.xpose.msra.mxu0 0.0
  %427 = vmatpush.xpose.msra.mxu0 0.0
  %428 = vmatpush.xpose.msra.mxu0 0.0
  %429 = vmatpush.xpose.msra.mxu0 0.0
  %430 = vmatpush.xpose.msra.mxu0 0.0
  %431 = vmatpush.xpose.msra.mxu0 0.0
  %432 = vmatpush.xpose.msra.mxu0 %v417
  %433 = vmatpush.xpose.msra.mxu0 %v416
  %434 = vmatmul.f32.gmra.mxu0 %v366
  %v435 = vpop.f32.mrf.mxu0
  %v436 = vadd.f32 %v124, %v435
  %437 = vmatmul.f32.gmra.mxu0 %v367
  %v438 = vpop.f32.mrf.mxu0
  %v439 = vadd.f32 %v125, %v438
  %440 = vdwg.mxu0
  %v441 = vmul.f32 %v436, 1.442695
  %v442 = vpow.pop %v441
  %v443 = vmul.f32 %v439, 1.442695
  %v444 = vpow.pop %v443
  %v445 = vsel %vm403, %v442, 0.0
  %446 = vadd.xlane.f32.xlu0 %v445
  %v447 = vpop.xlane.xlu0 %446
  %v448 = vsel %vm403, %v444, 0.0
  %449 = vadd.xlane.f32.xlu0 %v448
  %v450 = vpop.xlane.xlu0 %449
  %v451 = vrcp.pop %v447
  %v452 = vrcp.pop %v450
  %v453 = vmul.f32 %v442, %v451
  %v454 = vmul.f32 %v444, %v452
  %v455 = vmul.f32 %v311, %v134
  %v456 = vmul.f32 %v314, %v134
  %v458 = vsel %vm403, %v453, 0
  %v461 = vsel %vm403, %v454, 0
  %463 = vmatpush.msra.mxu0 0.0
  %464 = vmatpush.msra.mxu0 0.0
  %465 = vmatpush.msra.mxu0 0.0
  %466 = vmatpush.msra.mxu0 0.0
  %467 = vmatpush.msra.mxu0 0.0
  %468 = vmatpush.msra.mxu0 0.0
  %469 = vmatpush.msra.mxu0 0.0
  %470 = vmatpush.msra.mxu0 0.0
  %471 = vmatpush.msra.mxu0 0.0
  %472 = vmatpush.msra.mxu0 0.0
  %473 = vmatpush.msra.mxu0 0.0
  %474 = vmatpush.msra.mxu0 0.0
  %475 = vmatpush.msra.mxu0 0.0
  %476 = vmatpush.msra.mxu0 0.0
  %477 = vmatpush.msra.mxu0 %v456
  %478 = vmatpush.msra.mxu0 %v455
  %479 = vmatmul.f32.gmra.mxu0 %v458
  %v480 = vpop.f32.mrf.mxu0
  %v481 = vadd.f32 0.0, %v480
  %482 = vmatmul.f32.gmra.mxu0 %v461
  %v483 = vpop.f32.mrf.mxu0
  %v484 = vadd.f32 0.0, %v483
  %485 = vdwg.mxu0
  %v487 = vsel %vm403, %v412, 0
  %v490 = vsel %vm403, %v413, 0
  %492 = vmatpush.msra.mxu0 0.0
  %493 = vmatpush.msra.mxu0 0.0
  %494 = vmatpush.msra.mxu0 0.0
  %495 = vmatpush.msra.mxu0 0.0
  %496 = vmatpush.msra.mxu0 0.0
  %497 = vmatpush.msra.mxu0 0.0
  %498 = vmatpush.msra.mxu0 0.0
  %499 = vmatpush.msra.mxu0 0.0
  %500 = vmatpush.msra.mxu0 0.0
  %501 = vmatpush.msra.mxu0 0.0
  %502 = vmatpush.msra.mxu0 0.0
  %503 = vmatpush.msra.mxu0 0.0
  %504 = vmatpush.msra.mxu0 0.0
  %505 = vmatpush.msra.mxu0 0.0
  %506 = vmatpush.msra.mxu0 %v415
  %507 = vmatpush.msra.mxu0 %v414
  %508 = vmatmul.f32.gmra.mxu0 %v487
  %v509 = vpop.f32.mrf.mxu0
  %v510 = vadd.f32 %v481, %v509
  %511 = vmatmul.f32.gmra.mxu0 %v490
  %v512 = vpop.f32.mrf.mxu0
  %v513 = vadd.f32 %v484, %v512
  %514 = vdwg.mxu0
  %v515 = vmul.f32 %v372, %v138
  %v516 = vmul.f32 %v373, %v138
  %517 = vmatpush.xpose.msra.mxu0 0.0
  %518 = vmatpush.xpose.msra.mxu0 0.0
  %519 = vmatpush.xpose.msra.mxu0 0.0
  %520 = vmatpush.xpose.msra.mxu0 0.0
  %521 = vmatpush.xpose.msra.mxu0 0.0
  %522 = vmatpush.xpose.msra.mxu0 0.0
  %523 = vmatpush.xpose.msra.mxu0 0.0
  %524 = vmatpush.xpose.msra.mxu0 0.0
  %525 = vmatpush.xpose.msra.mxu0 0.0
  %526 = vmatpush.xpose.msra.mxu0 0.0
  %527 = vmatpush.xpose.msra.mxu0 0.0
  %528 = vmatpush.xpose.msra.mxu0 0.0
  %529 = vmatpush.xpose.msra.mxu0 0.0
  %530 = vmatpush.xpose.msra.mxu0 0.0
  %531 = vmatpush.xpose.msra.mxu0 %v516
  %532 = vmatpush.xpose.msra.mxu0 %v515
  %533 = vmatmul.f32.gmra.mxu0 %v366
  %v534 = vpop.f32.mrf.mxu0
  %v535 = vadd.f32 %v124, %v534
  %536 = vmatmul.f32.gmra.mxu0 %v367
  %v537 = vpop.f32.mrf.mxu0
  %v538 = vadd.f32 %v125, %v537
  %539 = vdwg.mxu0
  %v540 = vmul.f32 %v535, 1.442695
  %v541 = vpow.pop %v540
  %v542 = vmul.f32 %v538, 1.442695
  %v543 = vpow.pop %v542
  %v544 = vsel %vm403, %v541, 0.0
  %545 = vadd.xlane.f32.xlu0 %v544
  %v546 = vpop.xlane.xlu0 %545
  %v547 = vsel %vm403, %v543, 0.0
  %548 = vadd.xlane.f32.xlu0 %v547
  %v549 = vpop.xlane.xlu0 %548
  %v550 = vrcp.pop %v546
  %v551 = vrcp.pop %v549
  %v552 = vmul.f32 %v541, %v550
  %v553 = vmul.f32 %v543, %v551
  %v554 = vmul.f32 %v311, %v138
  %v555 = vmul.f32 %v314, %v138
  %v557 = vsel %vm403, %v552, 0
  %v560 = vsel %vm403, %v553, 0
  %562 = vmatpush.msra.mxu0 0.0
  %563 = vmatpush.msra.mxu0 0.0
  %564 = vmatpush.msra.mxu0 0.0
  %565 = vmatpush.msra.mxu0 0.0
  %566 = vmatpush.msra.mxu0 0.0
  %567 = vmatpush.msra.mxu0 0.0
  %568 = vmatpush.msra.mxu0 0.0
  %569 = vmatpush.msra.mxu0 0.0
  %570 = vmatpush.msra.mxu0 0.0
  %571 = vmatpush.msra.mxu0 0.0
  %572 = vmatpush.msra.mxu0 0.0
  %573 = vmatpush.msra.mxu0 0.0
  %574 = vmatpush.msra.mxu0 0.0
  %575 = vmatpush.msra.mxu0 0.0
  %576 = vmatpush.msra.mxu0 %v555
  %577 = vmatpush.msra.mxu0 %v554
  %578 = vmatmul.f32.gmra.mxu0 %v557
  %v579 = vpop.f32.mrf.mxu0
  %v580 = vadd.f32 0.0, %v579
  %581 = vmatmul.f32.gmra.mxu0 %v560
  %v582 = vpop.f32.mrf.mxu0
  %v583 = vadd.f32 0.0, %v582
  %584 = vdwg.mxu0
  %v585 = vadd.f32 %v510, %v580
  %v586 = vadd.f32 %v513, %v583
  %v587 = vmul.f32 %v372, %v142
  %v588 = vmul.f32 %v373, %v142
  %589 = vmatpush.xpose.msra.mxu0 0.0
  %590 = vmatpush.xpose.msra.mxu0 0.0
  %591 = vmatpush.xpose.msra.mxu0 0.0
  %592 = vmatpush.xpose.msra.mxu0 0.0
  %593 = vmatpush.xpose.msra.mxu0 0.0
  %594 = vmatpush.xpose.msra.mxu0 0.0
  %595 = vmatpush.xpose.msra.mxu0 0.0
  %596 = vmatpush.xpose.msra.mxu0 0.0
  %597 = vmatpush.xpose.msra.mxu0 0.0
  %598 = vmatpush.xpose.msra.mxu0 0.0
  %599 = vmatpush.xpose.msra.mxu0 0.0
  %600 = vmatpush.xpose.msra.mxu0 0.0
  %601 = vmatpush.xpose.msra.mxu0 0.0
  %602 = vmatpush.xpose.msra.mxu0 0.0
  %603 = vmatpush.xpose.msra.mxu0 %v588
  %604 = vmatpush.xpose.msra.mxu0 %v587
  %605 = vmatmul.f32.gmra.mxu0 %v366
  %v606 = vpop.f32.mrf.mxu0
  %v607 = vadd.f32 %v124, %v606
  %608 = vmatmul.f32.gmra.mxu0 %v367
  %v609 = vpop.f32.mrf.mxu0
  %v610 = vadd.f32 %v125, %v609
  %611 = vdwg.mxu0
  %v612 = vmul.f32 %v607, 1.442695
  %v613 = vpow.pop %v612
  %v614 = vmul.f32 %v610, 1.442695
  %v615 = vpow.pop %v614
  %v616 = vsel %vm403, %v613, 0.0
  %617 = vadd.xlane.f32.xlu0 %v616
  %v618 = vpop.xlane.xlu0 %617
  %v619 = vsel %vm403, %v615, 0.0
  %620 = vadd.xlane.f32.xlu0 %v619
  %v621 = vpop.xlane.xlu0 %620
  %v622 = vrcp.pop %v618
  %v623 = vrcp.pop %v621
  %v624 = vmul.f32 %v613, %v622
  %v625 = vmul.f32 %v615, %v623
  %v626 = vmul.f32 %v311, %v142
  %v627 = vmul.f32 %v314, %v142
  %v629 = vsel %vm403, %v624, 0
  %v632 = vsel %vm403, %v625, 0
  %634 = vmatpush.msra.mxu0 0.0
  %635 = vmatpush.msra.mxu0 0.0
  %636 = vmatpush.msra.mxu0 0.0
  %637 = vmatpush.msra.mxu0 0.0
  %638 = vmatpush.msra.mxu0 0.0
  %639 = vmatpush.msra.mxu0 0.0
  %640 = vmatpush.msra.mxu0 0.0
  %641 = vmatpush.msra.mxu0 0.0
  %642 = vmatpush.msra.mxu0 0.0
  %643 = vmatpush.msra.mxu0 0.0
  %644 = vmatpush.msra.mxu0 0.0
  %645 = vmatpush.msra.mxu0 0.0
  %646 = vmatpush.msra.mxu0 0.0
  %647 = vmatpush.msra.mxu0 0.0
  %648 = vmatpush.msra.mxu0 %v627
  %649 = vmatpush.msra.mxu0 %v626
  %650 = vmatmul.f32.gmra.mxu0 %v629
  %v651 = vpop.f32.mrf.mxu0
  %v652 = vadd.f32 0.0, %v651
  %653 = vmatmul.f32.gmra.mxu0 %v632
  %v654 = vpop.f32.mrf.mxu0
  %v655 = vadd.f32 0.0, %v654
  %656 = vdwg.mxu0
  %v657 = vadd.f32 %v585, %v652
  %v658 = vadd.f32 %v586, %v655
  %659 = vmatpush.msra.mxu0 %v182
  %660 = vmatpush.msra.mxu0 %v181
  %661 = vmatpush.msra.mxu0 %v180
  %662 = vmatpush.msra.mxu0 %v179
  %663 = vmatpush.msra.mxu0 %v178
  %664 = vmatpush.msra.mxu0 %v177
  %665 = vmatpush.msra.mxu0 %v176
  %666 = vmatpush.msra.mxu0 %v175
  %667 = vmatpush.msra.mxu0 %v174
  %668 = vmatpush.msra.mxu0 %v173
  %669 = vmatpush.msra.mxu0 %v172
  %670 = vmatpush.msra.mxu0 %v171
  %671 = vmatpush.msra.mxu0 %v170
  %672 = vmatpush.msra.mxu0 %v169
  %673 = vmatpush.msra.mxu0 %v168
  %674 = vmatpush.msra.mxu0 %v167
  %675 = vmatmul.f32.gmra.mxu0 %v657
  %v676 = vpop.f32.mrf.mxu0
  %v677 = vadd.f32 0.0, %v676
  %678 = vmatmul.f32.gmra.mxu0 %v658
  %v679 = vpop.f32.mrf.mxu0
  %v680 = vadd.f32 0.0, %v679
  %681 = vdwg.mxu0
  %v682 = vadd.f32 %v115, %v677
  %v683 = vadd.f32 %v118, %v680
  %v684 = vmul.f32 %v682, %v682
  %v685 = vmul.f32 %v683, %v683
  %v686 = vsel %vm201, %v684, 0.0
  %687 = vadd.xlane.f32.xlu0 %v686
  %v688 = vpop.xlane.xlu0 %687
  %v689 = vsel %vm201, %v685, 0.0
  %690 = vadd.xlane.f32.xlu0 %v689
  %v691 = vpop.xlane.xlu0 %690
  %v692 = vmul.f32 %v688, %v214
  %v693 = vmul.f32 %v691, %v214
  %v694 = vadd.f32 %v692, 1e-05
  %v695 = vadd.f32 %v693, 1e-05
  %v696 = vrsqrt.pop %v694
  %v697 = vmul.f32 %v696, %v694
  %v698 = vmul.f32 %v697, %v696
  %v699 = vmul.f32 0.5, %v698
  %v700 = vsub.f32 1.5, %v699
  %v701 = vmul.f32 %v696, %v700
  %vm702 = vweird.f32 %v694
  %vm703 = vweird.f32 %v696
  %vm704 = vmor %vm702, %vm703
  %v705 = vsel %vm704, %v696, %v701
  %v706 = vrsqrt.pop %v695
  %v707 = vmul.f32 %v706, %v695
  %v708 = vmul.f32 %v707, %v706
  %v709 = vmul.f32 0.5, %v708
  %v710 = vsub.f32 1.5, %v709
  %v711 = vmul.f32 %v706, %v710
  %vm712 = vweird.f32 %v695
  %vm713 = vweird.f32 %v706
  %vm714 = vmor %vm712, %vm713
  %v715 = vsel %vm714, %v706, %v711
  %v716 = vmul.f32 %v682, %v705
  %v717 = vmul.f32 %v683, %v715
  %v719 = vsel %vm201, %v716, 0
  %v722 = vsel %vm201, %v717, 0
  %724 = vmatpush.msra.mxu0 0.0
  %725 = vmatpush.msra.mxu0 0.0
  %726 = vmatpush.msra.mxu0 0.0
  %727 = vmatpush.msra.mxu0 0.0
  %728 = vmatpush.msra.mxu0 0.0
  %729 = vmatpush.msra.mxu0 0.0
  %730 = vmatpush.msra.mxu0 0.0
  %731 = vmatpush.msra.mxu0 0.0
  %732 = vmatpush.msra.mxu0 0.0
  %733 = vmatpush.msra.mxu0 0.0
  %734 = vmatpush.msra.mxu0 0.0
  %735 = vmatpush.msra.mxu0 0.0
  %736 = vmatpush.msra.mxu0 %v166
  %737 = vmatpush.msra.mxu0 %v165
  %738 = vmatpush.msra.mxu0 %v164
  %739 = vmatpush.msra.mxu0 %v163
  %740 = vmatmul.f32.gmra.mxu0 %v719
  %v741 = vpop.f32.mrf.mxu0
  %v742 = vadd.f32 0.0, %v741
  %743 = vmatmul.f32.gmra.mxu0 %v722
  %v744 = vpop.f32.mrf.mxu0
  %v745 = vadd.f32 0.0, %v744
  %746 = vdwg.mxu0
  %v747 = vmul.f32 %v742, 0.5
  %v748 = vmul.f32 %v745, 0.5
  %v749 = vmul.f32 %v742, 0.70710677
  %v750 = vmul.f32 %v745, 0.70710677
  %vm751 = vcmp.ge.f32.partialorder %v749, 0.0
  %vm752 = vcmp.ge.f32.partialorder %v750, 0.0
  %v753 = vsel %vm751, 1.0, -1.0
  %v754 = vsel %vm752, 1.0, -1.0
  %v755 = vand.u32 2147483647, %v749
  %v756 = vand.u32 2147483647, %v750
  %v757 = vmul.f32 %v755, 0.3275911
  %v758 = vmul.f32 %v756, 0.3275911
  %v759 = vadd.f32 %v757, 1.0
  %v760 = vadd.f32 %v758, 1.0
  %v761 = vrcp.pop %v759
  %v762 = vmul.f32 %v759, %v761
  %v763 = vsub.f32 1.0, %v762
  %v764 = vmul.f32 %v761, %v763
  %v765 = vadd.f32 %v761, %v764
  %vm766 = vweird.f32 %v759
  %vm767 = vweird.f32 %v761
  %vm768 = vmor %vm766, %vm767
  %v769 = vsel %vm768, %v761, %v765
  %v770 = vand.u32 2147483647, %v759
  %vm771 = vcmp.eq.f32.partialorder %v770, 8.507059e+37
  %v772 = vand.u32 %v759, 2147483648
  %v773 = vor.u32 1.1754944e-38, %v772
  %v774 = vsel %vm771, %v773, %v769
  %v775 = vmul.f32 1.0, %v774
  %v776 = vrcp.pop %v760
  %v777 = vmul.f32 %v760, %v776
  %v778 = vsub.f32 1.0, %v777
  %v779 = vmul.f32 %v776, %v778
  %v780 = vadd.f32 %v776, %v779
  %vm781 = vweird.f32 %v760
  %vm782 = vweird.f32 %v776
  %vm783 = vmor %vm781, %vm782
  %v784 = vsel %vm783, %v776, %v780
  %v785 = vand.u32 2147483647, %v760
  %vm786 = vcmp.eq.f32.partialorder %v785, 8.507059e+37
  %v787 = vand.u32 %v760, 2147483648
  %v788 = vor.u32 1.1754944e-38, %v787
  %v789 = vsel %vm786, %v788, %v784
  %v790 = vmul.f32 1.0, %v789
  %v791 = vmul.f32 %v775, 1.0614054
  %v792 = vmul.f32 %v790, 1.0614054
  %v793 = vadd.f32 %v791, -1.4531521
  %v794 = vadd.f32 %v792, -1.4531521
  %v795 = vmul.f32 %v793, %v775
  %v796 = vmul.f32 %v794, %v790
  %v797 = vadd.f32 %v795, 1.4214138
  %v798 = vadd.f32 %v796, 1.4214138
  %v799 = vmul.f32 %v797, %v775
  %v800 = vmul.f32 %v798, %v790
  %v801 = vadd.f32 %v799, -0.28449672
  %v802 = vadd.f32 %v800, -0.28449672
  %v803 = vmul.f32 %v801, %v775
  %v804 = vmul.f32 %v802, %v790
  %v805 = vadd.f32 %v803, 0.2548296
  %v806 = vadd.f32 %v804, 0.2548296
  %v807 = vmul.f32 %v805, %v775
  %v808 = vmul.f32 %v806, %v790
  %v809 = vsub.f32 0.0, %v755
  %v810 = vsub.f32 0.0, %v756
  %v811 = vmul.f32 %v809, %v755
  %v812 = vmul.f32 %v810, %v756
  %v813 = vmul.f32 %v811, 1.442695
  %v814 = vpow.pop %v813
  %v815 = vmul.f32 %v812, 1.442695
  %v816 = vpow.pop %v815
  %v817 = vmul.f32 %v807, %v814
  %v818 = vmul.f32 %v808, %v816
  %v819 = vsub.f32 1.0, %v817
  %v820 = vsub.f32 1.0, %v818
  %v821 = vmul.f32 %v753, %v819
  %v822 = vmul.f32 %v754, %v820
  %v823 = vadd.f32 %v821, 1.0
  %v824 = vadd.f32 %v822, 1.0
  %v825 = vmul.f32 %v747, %v823
  %v826 = vmul.f32 %v748, %v824
  %827 = vmatpush.msra.mxu0 %v198
  %828 = vmatpush.msra.mxu0 %v197
  %829 = vmatpush.msra.mxu0 %v196
  %830 = vmatpush.msra.mxu0 %v195
  %831 = vmatpush.msra.mxu0 %v194
  %832 = vmatpush.msra.mxu0 %v193
  %833 = vmatpush.msra.mxu0 %v192
  %834 = vmatpush.msra.mxu0 %v191
  %835 = vmatpush.msra.mxu0 %v190
  %836 = vmatpush.msra.mxu0 %v189
  %837 = vmatpush.msra.mxu0 %v188
  %838 = vmatpush.msra.mxu0 %v187
  %839 = vmatpush.msra.mxu0 %v186
  %840 = vmatpush.msra.mxu0 %v185
  %841 = vmatpush.msra.mxu0 %v184
  %842 = vmatpush.msra.mxu0 %v183
  %843 = vmatmul.f32.gmra.mxu0 %v825
  %v844 = vpop.f32.mrf.mxu0
  %v845 = vadd.f32 0.0, %v844
  %846 = vmatmul.f32.gmra.mxu0 %v826
  %v847 = vpop.f32.mrf.mxu0
  %v848 = vadd.f32 0.0, %v847
  %849 = vdwg.mxu0
  %v850 = vadd.f32 %v682, %v845
  %v851 = vadd.f32 %v683, %v848
  %v852 = vld [vmem:[%s2 + $0xa0] sm:$0xff]
  %v853 = vld [vmem:[%s2 + $0xa8] sm:$0xff]
  %v854 = vld [vmem:[%s2 + $0xb0] sm:$0xff]
  %v855 = vld [vmem:[%s2 + $0xb8] sm:$0xff]
  %v856 = vld [vmem:[%s2 + $0xc0] sm:$0xff]
  %v857 = vld [vmem:[%s2 + $0xc8] sm:$0xff]
  %v858 = vld [vmem:[%s2 + $0xd0] sm:$0xff]
  %v859 = vld [vmem:[%s2 + $0xd8] sm:$0xff]
  %v860 = vld [vmem:[%s2 + $0xe0] sm:$0xff]
  %v861 = vld [vmem:[%s2 + $0xe8] sm:$0xff]
  %v862 = vld [vmem:[%s2 + $0xf0] sm:$0xff]
  %v863 = vld [vmem:[%s2 + $0xf8] sm:$0xff]
  %v864 = vld [vmem:[%s2 + $0x100] sm:$0xff]
  %v865 = vld [vmem:[%s2 + $0x108] sm:$0xff]
  %v866 = vld [vmem:[%s2 + $0x110] sm:$0xff]
  %v867 = vld [vmem:[%s2 + $0x118] sm:$0xff]
  %v868 = vld [vmem:[%s2 + $0x120] sm:$0xff]
  %v869 = vld [vmem:[%s2 + $0x128] sm:$0xff]
  %v870 = vld [vmem:[%s2 + $0x130] sm:$0xff]
  %v871 = vld [vmem:[%s2 + $0x138] sm:$0xff]
  %v872 = vld [vmem:[%s3 + $0x20] sm:$0xff]
  %v873 = vld [vmem:[%s3 + $0x28] sm:$0xff]
  %v874 = vld [vmem:[%s3 + $0x30] sm:$0xff]
  %v875 = vld [vmem:[%s3 + $0x38] sm:$0xff]
  %v876 = vld [vmem:[%s4 + $0x200] sm:$0xff]
  %v877 = vld [vmem:[%s4 + $0x208] sm:$0xff]
  %v878 = vld [vmem:[%s4 + $0x210] sm:$0xff]
  %v879 = vld [vmem:[%s4 + $0x218] sm:$0xff]
  %v880 = vld [vmem:[%s4 + $0x220] sm:$0xff]
  %v881 = vld [vmem:[%s4 + $0x228] sm:$0xff]
  %v882 = vld [vmem:[%s4 + $0x230] sm:$0xff]
  %v883 = vld [vmem:[%s4 + $0x238] sm:$0xff]
  %v884 = vld [vmem:[%s4 + $0x240] sm:$0xff]
  %v885 = vld [vmem:[%s4 + $0x248] sm:$0xff]
  %v886 = vld [vmem:[%s4 + $0x250] sm:$0xff]
  %v887 = vld [vmem:[%s4 + $0x258] sm:$0xff]
  %v888 = vld [vmem:[%s4 + $0x260] sm:$0xff]
  %v889 = vld [vmem:[%s4 + $0x268] sm:$0xff]
  %v890 = vld [vmem:[%s4 + $0x270] sm:$0xff]
  %v891 = vld [vmem:[%s4 + $0x278] sm:$0xff]
  %v892 = vld [vmem:[%s4 + $0x280] sm:$0xff]
  %v893 = vld [vmem:[%s4 + $0x288] sm:$0xff]
  %v894 = vld [vmem:[%s4 + $0x290] sm:$0xff]
  %v895 = vld [vmem:[%s4 + $0x298] sm:$0xff]
  %v896 = vld [vmem:[%s4 + $0x2a0] sm:$0xff]
  %v897 = vld [vmem:[%s4 + $0x2a8] sm:$0xff]
  %v898 = vld [vmem:[%s4 + $0x2b0] sm:$0xff]
  %v899 = vld [vmem:[%s4 + $0x2b8] sm:$0xff]
  %v900 = vld [vmem:[%s4 + $0x2c0] sm:$0xff]
  %v901 = vld [vmem:[%s4 + $0x2c8] sm:$0xff]
  %v902 = vld [vmem:[%s4 + $0x2d0] sm:$0xff]
  %v903 = vld [vmem:[%s4 + $0x2d8] sm:$0xff]
  %v904 = vld [vmem:[%s4 + $0x2e0] sm:$0xff]
  %v905 = vld [vmem:[%s4 + $0x2e8] sm:$0xff]
  %v906 = vld [vmem:[%s4 + $0x2f0] sm:$0xff]
  %v907 = vld [vmem:[%s4 + $0x2f8] sm:$0xff]
  %v908 = vmul.f32 %v850, %v850
  %v909 = vmul.f32 %v851, %v851
  %v910 = vsel %vm201, %v908, 0.0
  %911 = vadd.xlane.f32.xlu0 %v910
  %v912 = vpop.xlane.xlu0 %911
  %v913 = vsel %vm201, %v909, 0.0
  %914 = vadd.xlane.f32.xlu0 %v913
  %v915 = vpop.xlane.xlu0 %914
  %v916 = vmul.f32 %v912, %v214
  %v917 = vmul.f32 %v915, %v214
  %v918 = vadd.f32 %v916, 1e-05
  %v919 = vadd.f32 %v917, 1e-05
  %v920 = vrsqrt.pop %v918
  %v921 = vmul.f32 %v920, %v918
  %v922 = vmul.f32 %v921, %v920
  %v923 = vmul.f32 0.5, %v922
  %v924 = vsub.f32 1.5, %v923
  %v925 = vmul.f32 %v920, %v924
  %vm926 = vweird.f32 %v918
  %vm927 = vweird.f32 %v920
  %vm928 = vmor %vm926, %vm927
  %v929 = vsel %vm928, %v920, %v925
  %v930 = vrsqrt.pop %v919
  %v931 = vmul.f32 %v930, %v919
  %v932 = vmul.f32 %v931, %v930
  %v933 = vmul.f32 0.5, %v932
  %v934 = vsub.f32 1.5, %v933
  %v935 = vmul.f32 %v930, %v934
  %vm936 = vweird.f32 %v919
  %vm937 = vweird.f32 %v930
  %vm938 = vmor %vm936, %vm937
  %v939 = vsel %vm938, %v930, %v935
  %v940 = vmul.f32 %v850, %v929
  %v941 = vmul.f32 %v851, %v939
  %v943 = vsel %vm201, %v940, 0
  %v946 = vsel %vm201, %v941, 0
  %948 = vmatpush.msra.mxu0 0.0
  %949 = vmatpush.msra.mxu0 0.0
  %950 = vmatpush.msra.mxu0 0.0
  %951 = vmatpush.msra.mxu0 0.0
  %952 = vmatpush.msra.mxu0 0.0
  %953 = vmatpush.msra.mxu0 0.0
  %954 = vmatpush.msra.mxu0 0.0
  %955 = vmatpush.msra.mxu0 0.0
  %956 = vmatpush.msra.mxu0 0.0
  %957 = vmatpush.msra.mxu0 0.0
  %958 = vmatpush.msra.mxu0 0.0
  %959 = vmatpush.msra.mxu0 0.0
  %960 = vmatpush.msra.mxu0 %v867
  %961 = vmatpush.msra.mxu0 %v862
  %962 = vmatpush.msra.mxu0 %v857
  %963 = vmatpush.msra.mxu0 %v852
  %964 = vmatmul.f32.gmra.mxu0 %v943
  %v965 = vpop.f32.mrf.mxu0
  %v966 = vadd.f32 0.0, %v965
  %967 = vmatmul.f32.gmra.mxu0 %v946
  %v968 = vpop.f32.mrf.mxu0
  %v969 = vadd.f32 0.0, %v968
  %970 = vdwg.mxu0
  %971 = vmatpush.msra.mxu0 0.0
  %972 = vmatpush.msra.mxu0 0.0
  %973 = vmatpush.msra.mxu0 0.0
  %974 = vmatpush.msra.mxu0 0.0
  %975 = vmatpush.msra.mxu0 0.0
  %976 = vmatpush.msra.mxu0 0.0
  %977 = vmatpush.msra.mxu0 0.0
  %978 = vmatpush.msra.mxu0 0.0
  %979 = vmatpush.msra.mxu0 0.0
  %980 = vmatpush.msra.mxu0 0.0
  %981 = vmatpush.msra.mxu0 0.0
  %982 = vmatpush.msra.mxu0 0.0
  %983 = vmatpush.msra.mxu0 %v868
  %984 = vmatpush.msra.mxu0 %v863
  %985 = vmatpush.msra.mxu0 %v858
  %986 = vmatpush.msra.mxu0 %v853
  %987 = vmatmul.f32.gmra.mxu0 %v943
  %v988 = vpop.f32.mrf.mxu0
  %v989 = vadd.f32 0.0, %v988
  %990 = vmatmul.f32.gmra.mxu0 %v946
  %v991 = vpop.f32.mrf.mxu0
  %v992 = vadd.f32 0.0, %v991
  %993 = vdwg.mxu0
  %994 = vmatpush.msra.mxu0 0.0
  %995 = vmatpush.msra.mxu0 0.0
  %996 = vmatpush.msra.mxu0 0.0
  %997 = vmatpush.msra.mxu0 0.0
  %998 = vmatpush.msra.mxu0 0.0
  %999 = vmatpush.msra.mxu0 0.0
  %1000 = vmatpush.msra.mxu0 0.0
  %1001 = vmatpush.msra.mxu0 0.0
  %1002 = vmatpush.msra.mxu0 0.0
  %1003 = vmatpush.msra.mxu0 0.0
  %1004 = vmatpush.msra.mxu0 0.0
  %1005 = vmatpush.msra.mxu0 0.0
  %1006 = vmatpush.msra.mxu0 %v869
  %1007 = vmatpush.msra.mxu0 %v864
  %1008 = vmatpush.msra.mxu0 %v859
  %1009 = vmatpush.msra.mxu0 %v854
  %1010 = vmatmul.f32.gmra.mxu0 %v943
  %v1011 = vpop.f32.mrf.mxu0
  %v1012 = vadd.f32 0.0, %v1011
  %1013 = vmatmul.f32.gmra.mxu0 %v946
  %v1014 = vpop.f32.mrf.mxu0
  %v1015 = vadd.f32 0.0, %v1014
  %1016 = vdwg.mxu0
  %1017 = vmatpush.msra.mxu0 0.0
  %1018 = vmatpush.msra.mxu0 0.0
  %1019 = vmatpush.msra.mxu0 0.0
  %1020 = vmatpush.msra.mxu0 0.0
  %1021 = vmatpush.msra.mxu0 0.0
  %1022 = vmatpush.msra.mxu0 0.0
  %1023 = vmatpush.msra.mxu0 0.0
  %1024 = vmatpush.msra.mxu0 0.0
  %1025 = vmatpush.msra.mxu0 0.0
  %1026 = vmatpush.msra.mxu0 0.0
  %1027 = vmatpush.msra.mxu0 0.0
  %1028 = vmatpush.msra.mxu0 0.0
  %1029 = vmatpush.msra.mxu0 %v870
  %1030 = vmatpush.msra.mxu0 %v865
  %1031 = vmatpush.msra.mxu0 %v860
  %1032 = vmatpush.msra.mxu0 %v855
  %1033 = vmatmul.f32.gmra.mxu0 %v943
  %v1034 = vpop.f32.mrf.mxu0
  %v1035 = vadd.f32 0.0, %v1034
  %1036 = vmatmul.f32.gmra.mxu0 %v946
  %v1037 = vpop.f32.mrf.mxu0
  %v1038 = vadd.f32 0.0, %v1037
  %1039 = vdwg.mxu0
  %1040 = vmatpush.msra.mxu0 0.0
  %1041 = vmatpush.msra.mxu0 0.0
  %1042 = vmatpush.msra.mxu0 0.0
  %1043 = vmatpush.msra.mxu0 0.0
  %1044 = vmatpush.msra.mxu0 0.0
  %1045 = vmatpush.msra.mxu0 0.0
  %1046 = vmatpush.msra.mxu0 0.0
  %1047 = vmatpush.msra.mxu0 0.0
  %1048 = vmatpush.msra.mxu0 0.0
  %1049 = vmatpush.msra.mxu0 0.0
  %1050 = vmatpush.msra.mxu0 0.0
  %1051 = vmatpush.msra.mxu0 0.0
  %1052 = vmatpush.msra.mxu0 %v871
  %1053 = vmatpush.msra.mxu0 %v866
  %1054 = vmatpush.msra.mxu0 %v861
  %1055 = vmatpush.msra.mxu0 %v856
  %1056 = vmatmul.f32.gmra.mxu0 %v943
  %v1057 = vpop.f32.mrf.mxu0
  %v1058 = vadd.f32 0.0, %v1057
  %1059 = vmatmul.f32.gmra.mxu0 %v946
  %v1060 = vpop.f32.mrf.mxu0
  %v1061 = vadd.f32 0.0, %v1060
  %1062 = vdwg.mxu0
  %v1063 = vmul.f32 %v966, %v120
  %v1064 = vmul.f32 %v969, %v121
  %v1065 = vmul.f32 %v1035, %v122
  %v1066 = vmul.f32 %v1038, %v123
  %v1067 = vadd.f32 %v1063, %v1065
  %v1068 = vadd.f32 %v1064, %v1066
  %v1069 = vmul.f32 %v989, %v120
  %v1070 = vmul.f32 %v992, %v121
  %v1071 = vmul.f32 %v1058, %v122
  %v1072 = vmul.f32 %v1061, %v123
  %v1073 = vadd.f32 %v1069, %v1071
  %v1074 = vadd.f32 %v1070, %v1072
  %v1075 = vmul.f32 %v1073, %v130
  %v1076 = vmul.f32 %v1074, %v130
  %1077 = vmatpush.xpose.msra.mxu0 0.0
  %1078 = vmatpush.xpose.msra.mxu0 0.0
  %1079 = vmatpush.xpose.msra.mxu0 0.0
  %1080 = vmatpush.xpose.msra.mxu0 0.0
  %1081 = vmatpush.xpose.msra.mxu0 0.0
  %1082 = vmatpush.xpose.msra.mxu0 0.0
  %1083 = vmatpush.xpose.msra.mxu0 0.0
  %1084 = vmatpush.xpose.msra.mxu0 0.0
  %1085 = vmatpush.xpose.msra.mxu0 0.0
  %1086 = vmatpush.xpose.msra.mxu0 0.0
  %1087 = vmatpush.xpose.msra.mxu0 0.0
  %1088 = vmatpush.xpose.msra.mxu0 0.0
  %1089 = vmatpush.xpose.msra.mxu0 0.0
  %1090 = vmatpush.xpose.msra.mxu0 0.0
  %1091 = vmatpush.xpose.msra.mxu0 %v1076
  %1092 = vmatpush.xpose.msra.mxu0 %v1075
  %1093 = vmatmul.f32.gmra.mxu0 %v1067
  %v1094 = vpop.f32.mrf.mxu0
  %v1095 = vadd.f32 %v124, %v1094
  %1096 = vmatmul.f32.gmra.mxu0 %v1068
  %v1097 = vpop.f32.mrf.mxu0
  %v1098 = vadd.f32 %v125, %v1097
  %1099 = vdwg.mxu0
  %v1100 = vmul.f32 %v1095, 1.442695
  %v1101 = vpow.pop %v1100
  %v1102 = vmul.f32 %v1098, 1.442695
  %v1103 = vpow.pop %v1102
  %v1104 = vsel %vm403, %v1101, 0.0
  %1105 = vadd.xlane.f32.xlu0 %v1104
  %v1106 = vpop.xlane.xlu0 %1105
  %v1107 = vsel %vm403, %v1103, 0.0
  %1108 = vadd.xlane.f32.xlu0 %v1107
  %v1109 = vpop.xlane.xlu0 %1108
  %v1110 = vrcp.pop %v1106
  %v1111 = vrcp.pop %v1109
  %v1112 = vmul.f32 %v1101, %v1110
  %v1113 = vmul.f32 %v1103, %v1111
  %v1114 = vmul.f32 %v1012, %v130
  %v1115 = vmul.f32 %v1015, %v130
  %v1116 = vmul.f32 %v1073, %v134
  %v1117 = vmul.f32 %v1074, %v134
  %1118 = vmatpush.xpose.msra.mxu0 0.0
  %1119 = vmatpush.xpose.msra.mxu0 0.0
  %1120 = vmatpush.xpose.msra.mxu0 0.0
  %1121 = vmatpush.xpose.msra.mxu0 0.0
  %1122 = vmatpush.xpose.msra.mxu0 0.0
  %1123 = vmatpush.xpose.msra.mxu0 0.0
  %1124 = vmatpush.xpose.msra.mxu0 0.0
  %1125 = vmatpush.xpose.msra.mxu0 0.0
  %1126 = vmatpush.xpose.msra.mxu0 0.0
  %1127 = vmatpush.xpose.msra.mxu0 0.0
  %1128 = vmatpush.xpose.msra.mxu0 0.0
  %1129 = vmatpush.xpose.msra.mxu0 0.0
  %1130 = vmatpush.xpose.msra.mxu0 0.0
  %1131 = vmatpush.xpose.msra.mxu0 0.0
  %1132 = vmatpush.xpose.msra.mxu0 %v1117
  %1133 = vmatpush.xpose.msra.mxu0 %v1116
  %1134 = vmatmul.f32.gmra.mxu0 %v1067
  %v1135 = vpop.f32.mrf.mxu0
  %v1136 = vadd.f32 %v124, %v1135
  %1137 = vmatmul.f32.gmra.mxu0 %v1068
  %v1138 = vpop.f32.mrf.mxu0
  %v1139 = vadd.f32 %v125, %v1138
  %1140 = vdwg.mxu0
  %v1141 = vmul.f32 %v1136, 1.442695
  %v1142 = vpow.pop %v1141
  %v1143 = vmul.f32 %v1139, 1.442695
  %v1144 = vpow.pop %v1143
  %v1145 = vsel %vm403, %v1142, 0.0
  %1146 = vadd.xlane.f32.xlu0 %v1145
  %v1147 = vpop.xlane.xlu0 %1146
  %v1148 = vsel %vm403, %v1144, 0.0
  %1149 = vadd.xlane.f32.xlu0 %v1148
  %v1150 = vpop.xlane.xlu0 %1149
  %v1151 = vrcp.pop %v1147
  %v1152 = vrcp.pop %v1150
  %v1153 = vmul.f32 %v1142, %v1151
  %v1154 = vmul.f32 %v1144, %v1152
  %v1155 = vmul.f32 %v1012, %v134
  %v1156 = vmul.f32 %v1015, %v134
  %v1158 = vsel %vm403, %v1153, 0
  %v1161 = vsel %vm403, %v1154, 0
  %1163 = vmatpush.msra.mxu0 0.0
  %1164 = vmatpush.msra.mxu0 0.0
  %1165 = vmatpush.msra.mxu0 0.0
  %1166 = vmatpush.msra.mxu0 0.0
  %1167 = vmatpush.msra.mxu0 0.0
  %1168 = vmatpush.msra.mxu0 0.0
  %1169 = vmatpush.msra.mxu0 0.0
  %1170 = vmatpush.msra.mxu0 0.0
  %1171 = vmatpush.msra.mxu0 0.0
  %1172 = vmatpush.msra.mxu0 0.0
  %1173 = vmatpush.msra.mxu0 0.0
  %1174 = vmatpush.msra.mxu0 0.0
  %1175 = vmatpush.msra.mxu0 0.0
  %1176 = vmatpush.msra.mxu0 0.0
  %1177 = vmatpush.msra.mxu0 %v1156
  %1178 = vmatpush.msra.mxu0 %v1155
  %1179 = vmatmul.f32.gmra.mxu0 %v1158
  %v1180 = vpop.f32.mrf.mxu0
  %v1181 = vadd.f32 0.0, %v1180
  %1182 = vmatmul.f32.gmra.mxu0 %v1161
  %v1183 = vpop.f32.mrf.mxu0
  %v1184 = vadd.f32 0.0, %v1183
  %1185 = vdwg.mxu0
  %v1187 = vsel %vm403, %v1112, 0
  %v1190 = vsel %vm403, %v1113, 0
  %1192 = vmatpush.msra.mxu0 0.0
  %1193 = vmatpush.msra.mxu0 0.0
  %1194 = vmatpush.msra.mxu0 0.0
  %1195 = vmatpush.msra.mxu0 0.0
  %1196 = vmatpush.msra.mxu0 0.0
  %1197 = vmatpush.msra.mxu0 0.0
  %1198 = vmatpush.msra.mxu0 0.0
  %1199 = vmatpush.msra.mxu0 0.0
  %1200 = vmatpush.msra.mxu0 0.0
  %1201 = vmatpush.msra.mxu0 0.0
  %1202 = vmatpush.msra.mxu0 0.0
  %1203 = vmatpush.msra.mxu0 0.0
  %1204 = vmatpush.msra.mxu0 0.0
  %1205 = vmatpush.msra.mxu0 0.0
  %1206 = vmatpush.msra.mxu0 %v1115
  %1207 = vmatpush.msra.mxu0 %v1114
  %1208 = vmatmul.f32.gmra.mxu0 %v1187
  %v1209 = vpop.f32.mrf.mxu0
  %v1210 = vadd.f32 %v1181, %v1209
  %1211 = vmatmul.f32.gmra.mxu0 %v1190
  %v1212 = vpop.f32.mrf.mxu0
  %v1213 = vadd.f32 %v1184, %v1212
  %1214 = vdwg.mxu0
  %v1215 = vmul.f32 %v1073, %v138
  %v1216 = vmul.f32 %v1074, %v138
  %1217 = vmatpush.xpose.msra.mxu0 0.0
  %1218 = vmatpush.xpose.msra.mxu0 0.0
  %1219 = vmatpush.xpose.msra.mxu0 0.0
  %1220 = vmatpush.xpose.msra.mxu0 0.0
  %1221 = vmatpush.xpose.msra.mxu0 0.0
  %1222 = vmatpush.xpose.msra.mxu0 0.0
  %1223 = vmatpush.xpose.msra.mxu0 0.0
  %1224 = vmatpush.xpose.msra.mxu0 0.0
  %1225 = vmatpush.xpose.msra.mxu0 0.0
  %1226 = vmatpush.xpose.msra.mxu0 0.0
  %1227 = vmatpush.xpose.msra.mxu0 0.0
  %1228 = vmatpush.xpose.msra.mxu0 0.0
  %1229 = vmatpush.xpose.msra.mxu0 0.0
  %1230 = vmatpush.xpose.msra.mxu0 0.0
  %1231 = vmatpush.xpose.msra.mxu0 %v1216
  %1232 = vmatpush.xpose.msra.mxu0 %v1215
  %1233 = vmatmul.f32.gmra.mxu0 %v1067
  %v1234 = vpop.f32.mrf.mxu0
  %v1235 = vadd.f32 %v124, %v1234
  %1236 = vmatmul.f32.gmra.mxu0 %v1068
  %v1237 = vpop.f32.mrf.mxu0
  %v1238 = vadd.f32 %v125, %v1237
  %1239 = vdwg.mxu0
  %v1240 = vmul.f32 %v1235, 1.442695
  %v1241 = vpow.pop %v1240
  %v1242 = vmul.f32 %v1238, 1.442695
  %v1243 = vpow.pop %v1242
  %v1244 = vsel %vm403, %v1241, 0.0
  %1245 = vadd.xlane.f32.xlu0 %v1244
  %v1246 = vpop.xlane.xlu0 %1245
  %v1247 = vsel %vm403, %v1243, 0.0
  %1248 = vadd.xlane.f32.xlu0 %v1247
  %v1249 = vpop.xlane.xlu0 %1248
  %v1250 = vrcp.pop %v1246
  %v1251 = vrcp.pop %v1249
  %v1252 = vmul.f32 %v1241, %v1250
  %v1253 = vmul.f32 %v1243, %v1251
  %v1254 = vmul.f32 %v1012, %v138
  %v1255 = vmul.f32 %v1015, %v138
  %v1257 = vsel %vm403, %v1252, 0
  %v1260 = vsel %vm403, %v1253, 0
  %1262 = vmatpush.msra.mxu0 0.0
  %1263 = vmatpush.msra.mxu0 0.0
  %1264 = vmatpush.msra.mxu0 0.0
  %1265 = vmatpush.msra.mxu0 0.0
  %1266 = vmatpush.msra.mxu0 0.0
  %1267 = vmatpush.msra.mxu0 0.0
  %1268 = vmatpush.msra.mxu0 0.0
  %1269 = vmatpush.msra.mxu0 0.0
  %1270 = vmatpush.msra.mxu0 0.0
  %1271 = vmatpush.msra.mxu0 0.0
  %1272 = vmatpush.msra.mxu0 0.0
  %1273 = vmatpush.msra.mxu0 0.0
  %1274 = vmatpush.msra.mxu0 0.0
  %1275 = vmatpush.msra.mxu0 0.0
  %1276 = vmatpush.msra.mxu0 %v1255
  %1277 = vmatpush.msra.mxu0 %v1254
  %1278 = vmatmul.f32.gmra.mxu0 %v1257
  %v1279 = vpop.f32.mrf.mxu0
  %v1280 = vadd.f32 0.0, %v1279
  %1281 = vmatmul.f32.gmra.mxu0 %v1260
  %v1282 = vpop.f32.mrf.mxu0
  %v1283 = vadd.f32 0.0, %v1282
  %1284 = vdwg.mxu0
  %v1285 = vadd.f32 %v1210, %v1280
  %v1286 = vadd.f32 %v1213, %v1283
  %v1287 = vmul.f32 %v1073, %v142
  %v1288 = vmul.f32 %v1074, %v142
  %1289 = vmatpush.xpose.msra.mxu0 0.0
  %1290 = vmatpush.xpose.msra.mxu0 0.0
  %1291 = vmatpush.xpose.msra.mxu0 0.0
  %1292 = vmatpush.xpose.msra.mxu0 0.0
  %1293 = vmatpush.xpose.msra.mxu0 0.0
  %1294 = vmatpush.xpose.msra.mxu0 0.0
  %1295 = vmatpush.xpose.msra.mxu0 0.0
  %1296 = vmatpush.xpose.msra.mxu0 0.0
  %1297 = vmatpush.xpose.msra.mxu0 0.0
  %1298 = vmatpush.xpose.msra.mxu0 0.0
  %1299 = vmatpush.xpose.msra.mxu0 0.0
  %1300 = vmatpush.xpose.msra.mxu0 0.0
  %1301 = vmatpush.xpose.msra.mxu0 0.0
  %1302 = vmatpush.xpose.msra.mxu0 0.0
  %1303 = vmatpush.xpose.msra.mxu0 %v1288
  %1304 = vmatpush.xpose.msra.mxu0 %v1287
  %1305 = vmatmul.f32.gmra.mxu0 %v1067
  %v1306 = vpop.f32.mrf.mxu0
  %v1307 = vadd.f32 %v124, %v1306
  %1308 = vmatmul.f32.gmra.mxu0 %v1068
  %v1309 = vpop.f32.mrf.mxu0
  %v1310 = vadd.f32 %v125, %v1309
  %1311 = vdwg.mxu0
  %v1312 = vmul.f32 %v1307, 1.442695
  %v1313 = vpow.pop %v1312
  %v1314 = vmul.f32 %v1310, 1.442695
  %v1315 = vpow.pop %v1314
  %v1316 = vsel %vm403, %v1313, 0.0
  %1317 = vadd.xlane.f32.xlu0 %v1316
  %v1318 = vpop.xlane.xlu0 %1317
  %v1319 = vsel %vm403, %v1315, 0.0
  %1320 = vadd.xlane.f32.xlu0 %v1319
  %v1321 = vpop.xlane.xlu0 %1320
  %v1322 = vrcp.pop %v1318
  %v1323 = vrcp.pop %v1321
  %v1324 = vmul.f32 %v1313, %v1322
  %v1325 = vmul.f32 %v1315, %v1323
  %v1326 = vmul.f32 %v1012, %v142
  %v1327 = vmul.f32 %v1015, %v142
  %v1329 = vsel %vm403, %v1324, 0
  %v1332 = vsel %vm403, %v1325, 0
  %1334 = vmatpush.msra.mxu0 0.0
  %1335 = vmatpush.msra.mxu0 0.0
  %1336 = vmatpush.msra.mxu0 0.0
  %1337 = vmatpush.msra.mxu0 0.0
  %1338 = vmatpush.msra.mxu0 0.0
  %1339 = vmatpush.msra.mxu0 0.0
  %1340 = vmatpush.msra.mxu0 0.0
  %1341 = vmatpush.msra.mxu0 0.0
  %1342 = vmatpush.msra.mxu0 0.0
  %1343 = vmatpush.msra.mxu0 0.0
  %1344 = vmatpush.msra.mxu0 0.0
  %1345 = vmatpush.msra.mxu0 0.0
  %1346 = vmatpush.msra.mxu0 0.0
  %1347 = vmatpush.msra.mxu0 0.0
  %1348 = vmatpush.msra.mxu0 %v1327
  %1349 = vmatpush.msra.mxu0 %v1326
  %1350 = vmatmul.f32.gmra.mxu0 %v1329
  %v1351 = vpop.f32.mrf.mxu0
  %v1352 = vadd.f32 0.0, %v1351
  %1353 = vmatmul.f32.gmra.mxu0 %v1332
  %v1354 = vpop.f32.mrf.mxu0
  %v1355 = vadd.f32 0.0, %v1354
  %1356 = vdwg.mxu0
  %v1357 = vadd.f32 %v1285, %v1352
  %v1358 = vadd.f32 %v1286, %v1355
  %1359 = vmatpush.msra.mxu0 %v891
  %1360 = vmatpush.msra.mxu0 %v890
  %1361 = vmatpush.msra.mxu0 %v889
  %1362 = vmatpush.msra.mxu0 %v888
  %1363 = vmatpush.msra.mxu0 %v887
  %1364 = vmatpush.msra.mxu0 %v886
  %1365 = vmatpush.msra.mxu0 %v885
  %1366 = vmatpush.msra.mxu0 %v884
  %1367 = vmatpush.msra.mxu0 %v883
  %1368 = vmatpush.msra.mxu0 %v882
  %1369 = vmatpush.msra.mxu0 %v881
  %1370 = vmatpush.msra.mxu0 %v880
  %1371 = vmatpush.msra.mxu0 %v879
  %1372 = vmatpush.msra.mxu0 %v878
  %1373 = vmatpush.msra.mxu0 %v877
  %1374 = vmatpush.msra.mxu0 %v876
  %1375 = vmatmul.f32.gmra.mxu0 %v1357
  %v1376 = vpop.f32.mrf.mxu0
  %v1377 = vadd.f32 0.0, %v1376
  %1378 = vmatmul.f32.gmra.mxu0 %v1358
  %v1379 = vpop.f32.mrf.mxu0
  %v1380 = vadd.f32 0.0, %v1379
  %1381 = vdwg.mxu0
  %v1382 = vadd.f32 %v850, %v1377
  %v1383 = vadd.f32 %v851, %v1380
  %v1384 = vmul.f32 %v1382, %v1382
  %v1385 = vmul.f32 %v1383, %v1383
  %v1386 = vsel %vm201, %v1384, 0.0
  %1387 = vadd.xlane.f32.xlu0 %v1386
  %v1388 = vpop.xlane.xlu0 %1387
  %v1389 = vsel %vm201, %v1385, 0.0
  %1390 = vadd.xlane.f32.xlu0 %v1389
  %v1391 = vpop.xlane.xlu0 %1390
  %v1392 = vmul.f32 %v1388, %v214
  %v1393 = vmul.f32 %v1391, %v214
  %v1394 = vadd.f32 %v1392, 1e-05
  %v1395 = vadd.f32 %v1393, 1e-05
  %v1396 = vrsqrt.pop %v1394
  %v1397 = vmul.f32 %v1396, %v1394
  %v1398 = vmul.f32 %v1397, %v1396
  %v1399 = vmul.f32 0.5, %v1398
  %v1400 = vsub.f32 1.5, %v1399
  %v1401 = vmul.f32 %v1396, %v1400
  %vm1402 = vweird.f32 %v1394
  %vm1403 = vweird.f32 %v1396
  %vm1404 = vmor %vm1402, %vm1403
  %v1405 = vsel %vm1404, %v1396, %v1401
  %v1406 = vrsqrt.pop %v1395
  %v1407 = vmul.f32 %v1406, %v1395
  %v1408 = vmul.f32 %v1407, %v1406
  %v1409 = vmul.f32 0.5, %v1408
  %v1410 = vsub.f32 1.5, %v1409
  %v1411 = vmul.f32 %v1406, %v1410
  %vm1412 = vweird.f32 %v1395
  %vm1413 = vweird.f32 %v1406
  %vm1414 = vmor %vm1412, %vm1413
  %v1415 = vsel %vm1414, %v1406, %v1411
  %v1416 = vmul.f32 %v1382, %v1405
  %v1417 = vmul.f32 %v1383, %v1415
  %v1419 = vsel %vm201, %v1416, 0
  %v1422 = vsel %vm201, %v1417, 0
  %1424 = vmatpush.msra.mxu0 0.0
  %1425 = vmatpush.msra.mxu0 0.0
  %1426 = vmatpush.msra.mxu0 0.0
  %1427 = vmatpush.msra.mxu0 0.0
  %1428 = vmatpush.msra.mxu0 0.0
  %1429 = vmatpush.msra.mxu0 0.0
  %1430 = vmatpush.msra.mxu0 0.0
  %1431 = vmatpush.msra.mxu0 0.0
  %1432 = vmatpush.msra.mxu0 0.0
  %1433 = vmatpush.msra.mxu0 0.0
  %1434 = vmatpush.msra.mxu0 0.0
  %1435 = vmatpush.msra.mxu0 0.0
  %1436 = vmatpush.msra.mxu0 %v875
  %1437 = vmatpush.msra.mxu0 %v874
  %1438 = vmatpush.msra.mxu0 %v873
  %1439 = vmatpush.msra.mxu0 %v872
  %1440 = vmatmul.f32.gmra.mxu0 %v1419
  %v1441 = vpop.f32.mrf.mxu0
  %v1442 = vadd.f32 0.0, %v1441
  %1443 = vmatmul.f32.gmra.mxu0 %v1422
  %v1444 = vpop.f32.mrf.mxu0
  %v1445 = vadd.f32 0.0, %v1444
  %1446 = vdwg.mxu0
  %v1447 = vmul.f32 %v1442, 0.5
  %v1448 = vmul.f32 %v1445, 0.5
  %v1449 = vmul.f32 %v1442, 0.70710677
  %v1450 = vmul.f32 %v1445, 0.70710677
  %vm1451 = vcmp.ge.f32.partialorder %v1449, 0.0
  %vm1452 = vcmp.ge.f32.partialorder %v1450, 0.0
  %v1453 = vsel %vm1451, 1.0, -1.0
  %v1454 = vsel %vm1452, 1.0, -1.0
  %v1455 = vand.u32 2147483647, %v1449
  %v1456 = vand.u32 2147483647, %v1450
  %v1457 = vmul.f32 %v1455, 0.3275911
  %v1458 = vmul.f32 %v1456, 0.3275911
  %v1459 = vadd.f32 %v1457, 1.0
  %v1460 = vadd.f32 %v1458, 1.0
  %v1461 = vrcp.pop %v1459
  %v1462 = vmul.f32 %v1459, %v1461
  %v1463 = vsub.f32 1.0, %v1462
  %v1464 = vmul.f32 %v1461, %v1463
  %v1465 = vadd.f32 %v1461, %v1464
  %vm1466 = vweird.f32 %v1459
  %vm1467 = vweird.f32 %v1461
  %vm1468 = vmor %vm1466, %vm1467
  %v1469 = vsel %vm1468, %v1461, %v1465
  %v1470 = vand.u32 2147483647, %v1459
  %vm1471 = vcmp.eq.f32.partialorder %v1470, 8.507059e+37
  %v1472 = vand.u32 %v1459, 2147483648
  %v1473 = vor.u32 1.1754944e-38, %v1472
  %v1474 = vsel %vm1471, %v1473, %v1469
  %v1475 = vmul.f32 1.0, %v1474
  %v1476 = vrcp.pop %v1460
  %v1477 = vmul.f32 %v1460, %v1476
  %v1478 = vsub.f32 1.0, %v1477
  %v1479 = vmul.f32 %v1476, %v1478
  %v1480 = vadd.f32 %v1476, %v1479
  %vm1481 = vweird.f32 %v1460
  %vm1482 = vweird.f32 %v1476
  %vm1483 = vmor %vm1481, %vm1482
  %v1484 = vsel %vm1483, %v1476, %v1480
  %v1485 = vand.u32 2147483647, %v1460
  %vm1486 = vcmp.eq.f32.partialorder %v1485, 8.507059e+37
  %v1487 = vand.u32 %v1460, 2147483648
  %v1488 = vor.u32 1.1754944e-38, %v1487
  %v1489 = vsel %vm1486, %v1488, %v1484
  %v1490 = vmul.f32 1.0, %v1489
  %v1491 = vmul.f32 %v1475, 1.0614054
  %v1492 = vmul.f32 %v1490, 1.0614054
  %v1493 = vadd.f32 %v1491, -1.4531521
  %v1494 = vadd.f32 %v1492, -1.4531521
  %v1495 = vmul.f32 %v1493, %v1475
  %v1496 = vmul.f32 %v1494, %v1490
  %v1497 = vadd.f32 %v1495, 1.4214138
  %v1498 = vadd.f32 %v1496, 1.4214138
  %v1499 = vmul.f32 %v1497, %v1475
  %v1500 = vmul.f32 %v1498, %v1490
  %v1501 = vadd.f32 %v1499, -0.28449672
  %v1502 = vadd.f32 %v1500, -0.28449672
  %v1503 = vmul.f32 %v1501, %v1475
  %v1504 = vmul.f32 %v1502, %v1490
  %v1505 = vadd.f32 %v1503, 0.2548296
  %v1506 = vadd.f32 %v1504, 0.2548296
  %v1507 = vmul.f32 %v1505, %v1475
  %v1508 = vmul.f32 %v1506, %v1490
  %v1509 = vsub.f32 0.0, %v1455
  %v1510 = vsub.f32 0.0, %v1456
  %v1511 = vmul.f32 %v1509, %v1455
  %v1512 = vmul.f32 %v1510, %v1456
  %v1513 = vmul.f32 %v1511, 1.442695
  %v1514 = vpow.pop %v1513
  %v1515 = vmul.f32 %v1512, 1.442695
  %v1516 = vpow.pop %v1515
  %v1517 = vmul.f32 %v1507, %v1514
  %v1518 = vmul.f32 %v1508, %v1516
  %v1519 = vsub.f32 1.0, %v1517
  %v1520 = vsub.f32 1.0, %v1518
  %v1521 = vmul.f32 %v1453, %v1519
  %v1522 = vmul.f32 %v1454, %v1520
  %v1523 = vadd.f32 %v1521, 1.0
  %v1524 = vadd.f32 %v1522, 1.0
  %v1525 = vmul.f32 %v1447, %v1523
  %v1526 = vmul.f32 %v1448, %v1524
  %1527 = vmatpush.msra.mxu0 %v907
  %1528 = vmatpush.msra.mxu0 %v906
  %1529 = vmatpush.msra.mxu0 %v905
  %1530 = vmatpush.msra.mxu0 %v904
  %1531 = vmatpush.msra.mxu0 %v903
  %1532 = vmatpush.msra.mxu0 %v902
  %1533 = vmatpush.msra.mxu0 %v901
  %1534 = vmatpush.msra.mxu0 %v900
  %1535 = vmatpush.msra.mxu0 %v899
  %1536 = vmatpush.msra.mxu0 %v898
  %1537 = vmatpush.msra.mxu0 %v897
  %1538 = vmatpush.msra.mxu0 %v896
  %1539 = vmatpush.msra.mxu0 %v895
  %1540 = vmatpush.msra.mxu0 %v894
  %1541 = vmatpush.msra.mxu0 %v893
  %1542 = vmatpush.msra.mxu0 %v892
  %1543 = vmatmul.f32.gmra.mxu0 %v1525
  %v1544 = vpop.f32.mrf.mxu0
  %v1545 = vadd.f32 0.0, %v1544
  %1546 = vmatmul.f32.gmra.mxu0 %v1526
  %v1547 = vpop.f32.mrf.mxu0
  %v1548 = vadd.f32 0.0, %v1547
  %1549 = vdwg.mxu0
  %v1550 = vadd.f32 %v1382, %v1545
  %v1551 = vadd.f32 %v1383, %v1548
  %v1553 = vsel %vm403, %v126, 0
  %1555 = vmatpush.msra.mxu0 0.0
  %1556 = vmatpush.msra.mxu0 0.0
  %1557 = vmatpush.msra.mxu0 0.0
  %1558 = vmatpush.msra.mxu0 0.0
  %1559 = vmatpush.msra.mxu0 0.0
  %1560 = vmatpush.msra.mxu0 0.0
  %1561 = vmatpush.msra.mxu0 0.0
  %1562 = vmatpush.msra.mxu0 0.0
  %1563 = vmatpush.msra.mxu0 0.0
  %1564 = vmatpush.msra.mxu0 0.0
  %1565 = vmatpush.msra.mxu0 0.0
  %1566 = vmatpush.msra.mxu0 0.0
  %1567 = vmatpush.msra.mxu0 0.0
  %1568 = vmatpush.msra.mxu0 0.0
  %1569 = vmatpush.msra.mxu0 %v1551
  %1570 = vmatpush.msra.mxu0 %v1550
  %1571 = vmatmul.f32.gmra.mxu0 %v1553
  %v1572 = vpop.f32.mrf.mxu0
  %v1573 = vadd.f32 0.0, %v1572
  %1574 = vdwg.mxu0
  %v1575 = vmul.f32 %v1573, %v1573
  %vm1576 = vcmask 254976
  %v1577 = vsel %vm1576, %v1575, 0.0
  %1578 = vadd.xlane.f32.xlu0 %v1577
  %v1579 = vpop.xlane.xlu0 %1578
  %v1580 = vmul.f32 %v1579, %v214
  %v1581 = vadd.f32 %v1580, 1e-05
  %v1582 = vrsqrt.pop %v1581
  %v1583 = vmul.f32 %v1582, %v1581
  %v1584 = vmul.f32 %v1583, %v1582
  %v1585 = vmul.f32 0.5, %v1584
  %v1586 = vsub.f32 1.5, %v1585
  %v1587 = vmul.f32 %v1582, %v1586
  %vm1588 = vweird.f32 %v1581
  %vm1589 = vweird.f32 %v1582
  %vm1590 = vmor %vm1588, %vm1589
  %v1591 = vsel %vm1590, %v1582, %v1587
  %v1592 = vmul.f32 %v1573, %v1591
  %v1593 = vld [vmem:[%s5] sm:$0xff]
  %v1594 = vld [vmem:[%s5 + $0x8] sm:$0xff]
  %v1595 = vld [vmem:[%s5 + $0x10] sm:$0xff]
  %v1596 = vld [vmem:[%s5 + $0x18] sm:$0xff]
  %v1597 = vld [vmem:[%s5 + $0x20] sm:$0xff]
  %v1598 = vld [vmem:[%s5 + $0x28] sm:$0xff]
  %v1599 = vld [vmem:[%s5 + $0x30] sm:$0xff]
  %v1600 = vld [vmem:[%s5 + $0x38] sm:$0xff]
  %v1602 = vsel %vm201, %v1592, 0
  %1604 = vmatpush.msra.mxu0 0.0
  %1605 = vmatpush.msra.mxu0 0.0
  %1606 = vmatpush.msra.mxu0 0.0
  %1607 = vmatpush.msra.mxu0 0.0
  %1608 = vmatpush.msra.mxu0 0.0
  %1609 = vmatpush.msra.mxu0 0.0
  %1610 = vmatpush.msra.mxu0 0.0
  %1611 = vmatpush.msra.mxu0 0.0
  %1612 = vmatpush.msra.mxu0 0.0
  %1613 = vmatpush.msra.mxu0 0.0
  %1614 = vmatpush.msra.mxu0 0.0
  %1615 = vmatpush.msra.mxu0 0.0
  %1616 = vmatpush.msra.mxu0 %v1599
  %1617 = vmatpush.msra.mxu0 %v1597
  %1618 = vmatpush.msra.mxu0 %v1595
  %1619 = vmatpush.msra.mxu0 %v1593
  %1620 = vmatmul.f32.gmra.mxu0 %v1602
  %v1621 = vpop.f32.mrf.mxu0
  %v1622 = vadd.f32 0.0, %v1621
  %1623 = vdwg.mxu0
  %1624 = vmatpush.msra.mxu0 0.0
  %1625 = vmatpush.msra.mxu0 0.0
  %1626 = vmatpush.msra.mxu0 0.0
  %1627 = vmatpush.msra.mxu0 0.0
  %1628 = vmatpush.msra.mxu0 0.0
  %1629 = vmatpush.msra.mxu0 0.0
  %1630 = vmatpush.msra.mxu0 0.0
  %1631 = vmatpush.msra.mxu0 0.0
  %1632 = vmatpush.msra.mxu0 0.0
  %1633 = vmatpush.msra.mxu0 0.0
  %1634 = vmatpush.msra.mxu0 0.0
  %1635 = vmatpush.msra.mxu0 0.0
  %1636 = vmatpush.msra.mxu0 %v1600
  %1637 = vmatpush.msra.mxu0 %v1598
  %1638 = vmatpush.msra.mxu0 %v1596
  %1639 = vmatpush.msra.mxu0 %v1594
  %1640 = vmatmul.f32.gmra.mxu0 %v1602
  %v1641 = vpop.f32.mrf.mxu0
  %v1642 = vadd.f32 0.0, %v1641
  %1643 = vdwg.mxu0
  %v1646 = vrot.slane %v1642, 6
  %vm1647 = vcmask 1041408
  %v1648 = vsel %vm1647, %v1622, %v1646
  %1650 = vst [vmem:[%s6] sm:$0xf] %v1648
  // Predicated region
  $region26: #{gpt_forward.1} parent=0 // pred_check
    _
  $region27: #{gpt_forward.1} parent=0 // pred_check_branch
    %1652 = sbr.rel (0) target = $region29
  $region28: #{gpt_forward.1} parent=0 // pred_region
    _
  $region29: #{gpt_forward.1} parent=0 // pred_fallthru
    _
  // Predicated region
  $region30: #{gpt_forward.1} parent=0 // pred_check
    _
  $region31: #{gpt_forward.1} parent=0 // pred_check_branch
    %1654 = sbr.rel (0) target = $region33
  $region32: #{gpt_forward.1} parent=0 // pred_region
    _
  $region33: #{gpt_forward.1} parent=0 // pred_fallthru
    _

</llo_original>
